<compile_context>
chip_gen: v7x
topology: tpu7x:2x2x1
jax: 0.10.0
libtpu: 0.0.40
codegen_flags: <defaults>
</compile_context>

<pallas_src>
import functools

import jax
import jax.numpy as jnp
from jax.experimental import pallas as pl
from jax.experimental.pallas import tpu as pltpu


NEG_SLOPE = 0.01  # F.leaky_relu default


def _round_up(n, m):
    return ((n + m - 1) // m) * m


def _leaky_relu(h):
    return jnp.where(h > 0, h, NEG_SLOPE * h)


def discriminator2_kernel(x_ref, v_ref, wvw1a_ref, b1_ref, w1x_ref,
                          w2_ref, b2_ref, w3_ref, b3_ref, w4r_ref, b4_ref,
                          out_ref):
    x = x_ref[...]                      # (TB, D) f32
    v = v_ref[...]                      # (TB, 1) f32

    # linear1 over the implicit concat [x | affine_v], with linear_v folded in:
    #   x @ W1x  (MXU, bf16 operands, f32 accumulate)
    #   + v * (wv @ W1a)  (VPU broadcast multiply, f32)
    #   + (b1 + bv @ W1a) (precomputed bias)
    h = jnp.dot(x.astype(jnp.bfloat16), w1x_ref[...],
                preferred_element_type=jnp.float32)
    h = _leaky_relu(h + v * wvw1a_ref[...] + b1_ref[...])

    h = _leaky_relu(
        jnp.dot(h.astype(jnp.bfloat16), w2_ref[...],
                preferred_element_type=jnp.float32) + b2_ref[...])
    h = _leaky_relu(
        jnp.dot(h.astype(jnp.bfloat16), w3_ref[...],
                preferred_element_type=jnp.float32) + b3_ref[...])

    # Head (output width 1): VPU broadcast multiply + lane reduce (keeps the
    # MXU free and the output store un-padded: only TB*4 bytes go to HBM).
    out_ref[...] = (jnp.sum(h * w4r_ref[...], axis=1, keepdims=True)
                    + b4_ref[...])


def prepare_params(params, input_dim):
    """One-time preprocessing of the (in, out)-layout f32 params.

    Splits W1 for the implicit concat, folds linear_v into linear1, casts the
    matmul weights to bf16, and lays the head weight out as a row. Do NOT call
    this per forward pass.
    """
    wv, bv, w1, b1, w2, b2, w3, b3, w4, b4 = params
    D = input_dim
    w1x = w1[:D]                       # (D, 512)
    w1a = w1[D:]                       # (A, 512)
    hp = jax.lax.Precision.HIGHEST
    wvw1a = jnp.dot(wv, w1a, precision=hp)            # (1, 512)
    b1f = b1 + jnp.dot(bv, w1a, precision=hp)         # (1, 512)
    # TODO(synk): head path assumes output width 1 (as in the module spec);
    # a general O would use an MXU dot + (TB, O) output block instead.
    assert w4.shape[1] == 1, "head optimized for output=1 (module default)"
    w4row = jnp.transpose(w4)                         # (1, 256) f32 (VPU head)
    return (
        wvw1a.astype(jnp.float32),
        b1f.astype(jnp.float32),
        w1x.astype(jnp.bfloat16),
        w2.astype(jnp.bfloat16),
        b2.astype(jnp.float32),
        w3.astype(jnp.bfloat16),
        b3.astype(jnp.float32),
        w4row.astype(jnp.float32),
        b4.astype(jnp.float32),        # (1, 1)
    )


@functools.partial(jax.jit, static_argnames=("block_b",))
def discriminator2_forward(x, v, prepared, *, block_b=1024):
    """x: (B, input_dim) f32, v: (B, 1) f32.  Returns (B, 1) f32."""
    wvw1a, b1f, w1x, w2, b2, w3, b3, w4row, b4 = prepared
    B, D = x.shape
    H1 = w1x.shape[1]
    H2 = w2.shape[1]
    H3 = w3.shape[1]

    # Batch tile: multiple of 8 sublanes, large enough to amortize the
    # ~0.35 us/step grid overhead, but capped so the grid has >=2 steps when B
    # allows it (lets v7x's two TensorCores both get work via the "parallel"
    # batch axis).  At TB=1024 the footprint (bf16 weights double-buffered +
    # f32 intermediates) is ~10-12 MiB, far under the explicit 32 MiB limit.
    TB = max(8, min(block_b, _round_up(pl.cdiv(B, 2), 8)))
    B_pad = _round_up(B, TB)
    if B_pad != B:
        x = jnp.pad(x, ((0, B_pad - B), (0, 0)))
        v = jnp.pad(v, ((0, B_pad - B), (0, 0)))

    grid = (B_pad // TB,)
    row_spec = lambda shape: pl.BlockSpec(shape, lambda i: (i, 0))  # streamed over batch
    rep_spec = lambda shape: pl.BlockSpec(shape, lambda i: (0, 0))  # VMEM-resident weights

    out = pl.pallas_call(
        discriminator2_kernel,
        grid=grid,
        in_specs=[
            row_spec((TB, D)),          # x
            row_spec((TB, 1)),          # v
            rep_spec((1, H1)),          # wv @ W1a   (linear_v fold)
            rep_spec((1, H1)),          # b1 + bv @ W1a
            rep_spec((D, H1)),          # W1[:D]  (bf16)
            rep_spec((H1, H2)),         # W2      (bf16)
            rep_spec((1, H2)),          # b2
            rep_spec((H2, H3)),         # W3      (bf16)
            rep_spec((1, H3)),          # b3
            rep_spec((1, H3)),          # W4 row  (f32, VPU head)
            rep_spec((1, 1)),           # b4
        ],
        out_specs=row_spec((TB, 1)),
        out_shape=jax.ShapeDtypeStruct((B_pad, 1), jnp.float32),
        compiler_params=pltpu.CompilerParams(
            dimension_semantics=("parallel",),
            vmem_limit_bytes=32 * 1024 * 1024),
    )(x, v, wvw1a, b1f, w1x, w2, b2, w3, b3, w4row, b4)

    return out[:B]


def init_params(key, input_dim=96, affine_dim=64, output=1):
    """Mimics the PyTorch weights_init: kaiming_uniform_(a=0, fan_in,
    leaky_relu) => U(+/- sqrt(6/fan_in)); biases = 0.01.  (in, out) layout."""
    def kaiming_uniform(k, fan_in, shape):
        bound = float(jnp.sqrt(6.0 / fan_in))
        return jax.random.uniform(k, shape, jnp.float32, -bound, bound)

    ks = jax.random.split(key, 5)
    wv = kaiming_uniform(ks[0], 1, (1, affine_dim))
    bv = jnp.full((1, affine_dim), 0.01, jnp.float32)
    w1 = kaiming_uniform(ks[1], input_dim + affine_dim,
                         (input_dim + affine_dim, 512))
    b1 = jnp.full((1, 512), 0.01, jnp.float32)
    w2 = kaiming_uniform(ks[2], 512, (512, 512))
    b2 = jnp.full((1, 512), 0.01, jnp.float32)
    w3 = kaiming_uniform(ks[3], 512, (512, 256))
    b3 = jnp.full((1, 256), 0.01, jnp.float32)
    w4 = kaiming_uniform(ks[4], 256, (256, output))
    b4 = jnp.full((1, output), 0.01, jnp.float32)
    return (wv, bv, w1, b1, w2, b2, w3, b3, w4, b4)


def discriminator2_reference(x, v, params):
    """Pure-JAX f32 reference (mirrors the PyTorch forward exactly)."""
    wv, bv, w1, b1, w2, b2, w3, b3, w4, b4 = params
    hp = jax.lax.Precision.HIGHEST
    affine_v = jnp.dot(v, wv, precision=hp) + bv
    h = jnp.concatenate([x, affine_v], axis=1)
    h = _leaky_relu(jnp.dot(h, w1, precision=hp) + b1)
    h = _leaky_relu(jnp.dot(h, w2, precision=hp) + b2)
    h = _leaky_relu(jnp.dot(h, w3, precision=hp) + b3)
    return jnp.dot(h, w4, precision=hp) + b4


if __name__ == "__main__":
    B = 8
    INPUT_DIM = 8 * 6 * 2     # 96
    AFFINE_DIM = 64
    OUTPUT = 1

    key = jax.random.PRNGKey(0)
    k_x, k_v, k_p = jax.random.split(key, 3)
    x = jax.random.normal(k_x, (B, INPUT_DIM), dtype=jnp.float32)
    v = jax.random.normal(k_v, (B, 1), dtype=jnp.float32)
    params = init_params(k_p, INPUT_DIM, AFFINE_DIM, OUTPUT)

    prepared = prepare_params(params, INPUT_DIM)     # one-time weight prep
    out = discriminator2_forward(x, v, prepared)
    jax.block_until_ready(out)

    ref = discriminator2_reference(x, v, params)
    assert out.shape == (B, OUTPUT), out.shape
    # bf16 MXU operands vs. the f32 HIGHEST reference: loose tolerance.
    err = float(jnp.max(jnp.abs(out - ref)))
    assert jnp.allclose(out, ref, atol=5e-2, rtol=5e-2), err

    print("KERNEL_OK")
</pallas_src>

<mosaic_0001>
module attributes {stable_mosaic.version = 11 : i64} {
  func.func @discriminator2_kernel(%arg0: i32, %arg1: memref<8x96xf32, #tpu.memory_space<vmem>>, %arg2: memref<8x1xf32, #tpu.memory_space<vmem>>, %arg3: memref<1x512xf32, #tpu.memory_space<vmem>>, %arg4: memref<1x512xf32, #tpu.memory_space<vmem>>, %arg5: memref<96x512xbf16, #tpu.memory_space<vmem>>, %arg6: memref<512x512xbf16, #tpu.memory_space<vmem>>, %arg7: memref<1x512xf32, #tpu.memory_space<vmem>>, %arg8: memref<512x256xbf16, #tpu.memory_space<vmem>>, %arg9: memref<1x256xf32, #tpu.memory_space<vmem>>, %arg10: memref<1x256xf32, #tpu.memory_space<vmem>>, %arg11: memref<1x1xf32, #tpu.memory_space<vmem>>, %arg12: memref<8x1xf32, #tpu.memory_space<vmem>>) attributes {dimension_semantics = [#tpu.dimension_semantics<parallel>], iteration_bounds = array<i64: 1>, scalar_prefetch = 0 : i64, scratch_operands = 0 : i64, tpu.core_type = #tpu.core_type<tc>, window_params = [{transform_indices = @transform_0, window_bounds = array<i64: 8, 96>}, {transform_indices = @transform_1, window_bounds = array<i64: 8, 1>}, {pipeline_mode = #tpu.pipeline_mode<synchronous>, transform_indices = @transform_2, window_bounds = array<i64: 1, 512>}, {pipeline_mode = #tpu.pipeline_mode<synchronous>, transform_indices = @transform_3, window_bounds = array<i64: 1, 512>}, {pipeline_mode = #tpu.pipeline_mode<synchronous>, transform_indices = @transform_4, window_bounds = array<i64: 96, 512>}, {pipeline_mode = #tpu.pipeline_mode<synchronous>, transform_indices = @transform_5, window_bounds = array<i64: 512, 512>}, {pipeline_mode = #tpu.pipeline_mode<synchronous>, transform_indices = @transform_6, window_bounds = array<i64: 1, 512>}, {pipeline_mode = #tpu.pipeline_mode<synchronous>, transform_indices = @transform_7, window_bounds = array<i64: 512, 256>}, {pipeline_mode = #tpu.pipeline_mode<synchronous>, transform_indices = @transform_8, window_bounds = array<i64: 1, 256>}, {pipeline_mode = #tpu.pipeline_mode<synchronous>, transform_indices = @transform_9, window_bounds = array<i64: 1, 256>}, {pipeline_mode = #tpu.pipeline_mode<synchronous>, transform_indices = @transform_10, window_bounds = array<i64: 1, 1>}, {transform_indices = @transform_11, window_bounds = array<i64: 8, 1>}]} {
    %c0 = arith.constant 0 : index
    %c0_0 = arith.constant 0 : index
    %0 = vector.load %arg1[%c0, %c0_0] : memref<8x96xf32, #tpu.memory_space<vmem>>, vector<8x96xf32>
    %c0_1 = arith.constant 0 : index
    %c0_2 = arith.constant 0 : index
    %1 = vector.load %arg2[%c0_1, %c0_2] : memref<8x1xf32, #tpu.memory_space<vmem>>, vector<8x1xf32>
    %2 = arith.truncf %0 : vector<8x96xf32> to vector<8x96xbf16>
    %c0_3 = arith.constant 0 : index
    %c0_4 = arith.constant 0 : index
    %3 = vector.load %arg5[%c0_3, %c0_4] : memref<96x512xbf16, #tpu.memory_space<vmem>>, vector<96x512xbf16>
    %cst = arith.constant dense<0.000000e+00> : vector<8x512xf32>
    %4 = tpu.matmul %2, %3, %cst {dimension_numbers = #tpu.dot_dimension_numbers<[1], [0], [0], [1], [0, 0, 1, 1], [], []>} : vector<8x96xbf16>, vector<96x512xbf16>, vector<8x512xf32> -> vector<8x512xf32>
    %c0_5 = arith.constant 0 : index
    %c0_6 = arith.constant 0 : index
    %5 = vector.load %arg3[%c0_5, %c0_6] : memref<1x512xf32, #tpu.memory_space<vmem>>, vector<1x512xf32>
    %6 = vector.broadcast %1 : vector<8x1xf32> to vector<8x512xf32>
    %7 = vector.broadcast %5 : vector<1x512xf32> to vector<8x512xf32>
    %8 = arith.mulf %6, %7 : vector<8x512xf32>
    %9 = arith.addf %4, %8 : vector<8x512xf32>
    %c0_7 = arith.constant 0 : index
    %c0_8 = arith.constant 0 : index
    %10 = vector.load %arg4[%c0_7, %c0_8] : memref<1x512xf32, #tpu.memory_space<vmem>>, vector<1x512xf32>
    %11 = vector.broadcast %10 : vector<1x512xf32> to vector<8x512xf32>
    %12 = arith.addf %9, %11 : vector<8x512xf32>
    %cst_9 = arith.constant 0.000000e+00 : f32
    %13 = vector.broadcast %cst_9 : f32 to vector<8x512xf32>
    %14 = arith.cmpf ogt, %12, %13 : vector<8x512xf32>
    %cst_10 = arith.constant 0.00999999977 : f32
    %15 = vector.broadcast %cst_10 : f32 to vector<8x512xf32>
    %16 = arith.mulf %15, %12 : vector<8x512xf32>
    %17 = arith.select %14, %12, %16 : vector<8x512xi1>, vector<8x512xf32>
    %18 = arith.truncf %17 : vector<8x512xf32> to vector<8x512xbf16>
    %c0_11 = arith.constant 0 : index
    %c0_12 = arith.constant 0 : index
    %19 = vector.load %arg6[%c0_11, %c0_12] : memref<512x512xbf16, #tpu.memory_space<vmem>>, vector<512x512xbf16>
    %cst_13 = arith.constant dense<0.000000e+00> : vector<8x512xf32>
    %20 = tpu.matmul %18, %19, %cst_13 {dimension_numbers = #tpu.dot_dimension_numbers<[1], [0], [0], [1], [0, 0, 1, 1], [], []>} : vector<8x512xbf16>, vector<512x512xbf16>, vector<8x512xf32> -> vector<8x512xf32>
    %c0_14 = arith.constant 0 : index
    %c0_15 = arith.constant 0 : index
    %21 = vector.load %arg7[%c0_14, %c0_15] : memref<1x512xf32, #tpu.memory_space<vmem>>, vector<1x512xf32>
    %22 = vector.broadcast %21 : vector<1x512xf32> to vector<8x512xf32>
    %23 = arith.addf %20, %22 : vector<8x512xf32>
    %cst_16 = arith.constant 0.000000e+00 : f32
    %24 = vector.broadcast %cst_16 : f32 to vector<8x512xf32>
    %25 = arith.cmpf ogt, %23, %24 : vector<8x512xf32>
    %cst_17 = arith.constant 0.00999999977 : f32
    %26 = vector.broadcast %cst_17 : f32 to vector<8x512xf32>
    %27 = arith.mulf %26, %23 : vector<8x512xf32>
    %28 = arith.select %25, %23, %27 : vector<8x512xi1>, vector<8x512xf32>
    %29 = arith.truncf %28 : vector<8x512xf32> to vector<8x512xbf16>
    %c0_18 = arith.constant 0 : index
    %c0_19 = arith.constant 0 : index
    %30 = vector.load %arg8[%c0_18, %c0_19] : memref<512x256xbf16, #tpu.memory_space<vmem>>, vector<512x256xbf16>
    %cst_20 = arith.constant dense<0.000000e+00> : vector<8x256xf32>
    %31 = tpu.matmul %29, %30, %cst_20 {dimension_numbers = #tpu.dot_dimension_numbers<[1], [0], [0], [1], [0, 0, 1, 1], [], []>} : vector<8x512xbf16>, vector<512x256xbf16>, vector<8x256xf32> -> vector<8x256xf32>
    %c0_21 = arith.constant 0 : index
    %c0_22 = arith.constant 0 : index
    %32 = vector.load %arg9[%c0_21, %c0_22] : memref<1x256xf32, #tpu.memory_space<vmem>>, vector<1x256xf32>
    %33 = vector.broadcast %32 : vector<1x256xf32> to vector<8x256xf32>
    %34 = arith.addf %31, %33 : vector<8x256xf32>
    %cst_23 = arith.constant 0.000000e+00 : f32
    %35 = vector.broadcast %cst_23 : f32 to vector<8x256xf32>
    %36 = arith.cmpf ogt, %34, %35 : vector<8x256xf32>
    %cst_24 = arith.constant 0.00999999977 : f32
    %37 = vector.broadcast %cst_24 : f32 to vector<8x256xf32>
    %38 = arith.mulf %37, %34 : vector<8x256xf32>
    %39 = arith.select %36, %34, %38 : vector<8x256xi1>, vector<8x256xf32>
    %c0_25 = arith.constant 0 : index
    %c0_26 = arith.constant 0 : index
    %40 = vector.load %arg10[%c0_25, %c0_26] : memref<1x256xf32, #tpu.memory_space<vmem>>, vector<1x256xf32>
    %41 = vector.broadcast %40 : vector<1x256xf32> to vector<8x256xf32>
    %42 = arith.mulf %39, %41 : vector<8x256xf32>
    %cst_27 = arith.constant dense<0.000000e+00> : vector<8xf32>
    %43 = vector.multi_reduction <add>, %42, %cst_27 [1] : vector<8x256xf32> to vector<8xf32>
    %44 = vector.shape_cast %43 : vector<8xf32> to vector<8x1xf32>
    %c0_28 = arith.constant 0 : index
    %c0_29 = arith.constant 0 : index
    %45 = vector.load %arg11[%c0_28, %c0_29] : memref<1x1xf32, #tpu.memory_space<vmem>>, vector<1x1xf32>
    %46 = vector.broadcast %45 : vector<1x1xf32> to vector<8x1xf32>
    %47 = arith.addf %44, %46 : vector<8x1xf32>
    %c0_30 = arith.constant 0 : index
    %c0_31 = arith.constant 0 : index
    %48 = vector.load %arg12[%c0_30, %c0_31] : memref<8x1xf32, #tpu.memory_space<vmem>>, vector<8x1xf32>
    tpu.vector_store %arg12[%c0_30, %c0_31], %47 {strides = array<i32>} : memref<8x1xf32, #tpu.memory_space<vmem>>, vector<8x1xf32>,
    return
  }
  func.func @transform_0(%arg0: i32) -> (i32, i32) {
    %c0_i32 = arith.constant 0 : i32
    %c0_i32_0 = arith.constant 0 : i32
    return %arg0, %c0_i32 : i32, i32
  }
  func.func @transform_1(%arg0: i32) -> (i32, i32) {
    %c0_i32 = arith.constant 0 : i32
    %c0_i32_0 = arith.constant 0 : i32
    return %arg0, %c0_i32 : i32, i32
  }
  func.func @transform_2(%arg0: i32) -> (i32, i32) {
    %c0_i32 = arith.constant 0 : i32
    %c0_i32_0 = arith.constant 0 : i32
    %c0_i32_1 = arith.constant 0 : i32
    return %c0_i32, %c0_i32_0 : i32, i32
  }
  func.func @transform_3(%arg0: i32) -> (i32, i32) {
    %c0_i32 = arith.constant 0 : i32
    %c0_i32_0 = arith.constant 0 : i32
    %c0_i32_1 = arith.constant 0 : i32
    return %c0_i32, %c0_i32_0 : i32, i32
  }
  func.func @transform_4(%arg0: i32) -> (i32, i32) {
    %c0_i32 = arith.constant 0 : i32
    %c0_i32_0 = arith.constant 0 : i32
    %c0_i32_1 = arith.constant 0 : i32
    return %c0_i32, %c0_i32_0 : i32, i32
  }
  func.func @transform_5(%arg0: i32) -> (i32, i32) {
    %c0_i32 = arith.constant 0 : i32
    %c0_i32_0 = arith.constant 0 : i32
    %c0_i32_1 = arith.constant 0 : i32
    return %c0_i32, %c0_i32_0 : i32, i32
  }
  func.func @transform_6(%arg0: i32) -> (i32, i32) {
    %c0_i32 = arith.constant 0 : i32
    %c0_i32_0 = arith.constant 0 : i32
    %c0_i32_1 = arith.constant 0 : i32
    return %c0_i32, %c0_i32_0 : i32, i32
  }
  func.func @transform_7(%arg0: i32) -> (i32, i32) {
    %c0_i32 = arith.constant 0 : i32
    %c0_i32_0 = arith.constant 0 : i32
    %c0_i32_1 = arith.constant 0 : i32
    return %c0_i32, %c0_i32_0 : i32, i32
  }
  func.func @transform_8(%arg0: i32) -> (i32, i32) {
    %c0_i32 = arith.constant 0 : i32
    %c0_i32_0 = arith.constant 0 : i32
    %c0_i32_1 = arith.constant 0 : i32
    return %c0_i32, %c0_i32_0 : i32, i32
  }
  func.func @transform_9(%arg0: i32) -> (i32, i32) {
    %c0_i32 = arith.constant 0 : i32
    %c0_i32_0 = arith.constant 0 : i32
    %c0_i32_1 = arith.constant 0 : i32
    return %c0_i32, %c0_i32_0 : i32, i32
  }
  func.func @transform_10(%arg0: i32) -> (i32, i32) {
    %c0_i32 = arith.constant 0 : i32
    %c0_i32_0 = arith.constant 0 : i32
    %c0_i32_1 = arith.constant 0 : i32
    return %c0_i32, %c0_i32_0 : i32, i32
  }
  func.func @transform_11(%arg0: i32) -> (i32, i32) {
    %c0_i32 = arith.constant 0 : i32
    %c0_i32_0 = arith.constant 0 : i32
    return %arg0, %c0_i32 : i32, i32
  }
}

</mosaic_0001>

<llo_original>
// kernel: discriminator2_forward.1
$region0: #{discriminator2_forward.1}
  #allocation0 [shape = 'u32[]', space=smem, size = 0x4, offset = 0x4, fixed_abs, tag = 'smem constant byte address 0x4 - core index']
  #allocation1 [shape = 'u32[144,128]{1,0:T(1,128)}', space=vmem, size = 0x12000, scoped, tag = 'internal scratch']
  #allocation2 [shape = 'f32[1,1]{1,0:T(1,128)S(1)}', space=vmem, size = 0x200, scoped, tag = 'scoped memory for discriminator2_forward.1']
  %s0 = inlined_call_operand.vmem [shape: f32[8,96], index: 0, kind: input, shape index: {}]
  %s1 = inlined_call_operand.vmem [shape: f32[8,1], index: 1, kind: input, shape index: {}]
  %s2 = inlined_call_operand.vmem [shape: f32[1,512], index: 2, kind: input, shape index: {}]
  %s3 = inlined_call_operand.vmem [shape: f32[1,512], index: 3, kind: input, shape index: {}]
  %s4 = inlined_call_operand.hbm [shape: bf16[96,512], index: 4, kind: input, shape index: {}]
  %s5 = inlined_call_operand.hbm [shape: bf16[512,512], index: 5, kind: input, shape index: {}]
  %s6 = inlined_call_operand.vmem [shape: f32[1,512], index: 6, kind: input, shape index: {}]
  %s7 = inlined_call_operand.hbm [shape: bf16[512,256], index: 7, kind: input, shape index: {}]
  %s8 = inlined_call_operand.vmem [shape: f32[1,256], index: 8, kind: input, shape index: {}]
  %s9 = inlined_call_operand.vmem [shape: f32[1,256], index: 9, kind: input, shape index: {}]
  %s10 = inlined_call_operand.<no memory space> [shape: f32[1,1], index: 10, kind: input, shape index: {}]
  %s11 = inlined_call_operand.vmem [shape: f32[8,1], index: 11, kind: output, shape index: {}]
  %s12 = sld [smem:[#allocation0]]
  $region66: #{discriminator2_forward.1} parent=0
    _
  %s14 = ssub.s32 1, %s12
  %s15 = scalar_select 0, %s14, %s12
  %v16 = vstv %s10
  %17 = vst [vmem:[#allocation2] sm:$0x1] %v16
  $region1: #{discriminator2_forward.1} parent=0
    #allocation3 [shape = 'u8[98304]{0}', space=vmem, size = 0x18000, scoped, tag = 'input window, operand 4, single buffered']
    #allocation4 [shape = 's32[1]{0}', space=sflag, size = 0x4, scoped, tag = 'scoped memory for discriminator2_forward.1']
    #allocation5 [shape = 'u8[524288]{0}', space=vmem, size = 0x80000, scoped, tag = 'input window, operand 5, single buffered']
    #allocation6 [shape = 's32[1]{0}', space=sflag, size = 0x4, scoped, tag = 'scoped memory for discriminator2_forward.1']
    #allocation7 [shape = 'u8[262144]{0}', space=vmem, size = 0x40000, scoped, tag = 'input window, operand 7, single buffered']
    %18 = vsyncpa [#allocation4], 0
    %19 = vsyncpa [#allocation6], 0
    // Predicated region
    $region2: #{discriminator2_forward.1} parent=1 // pred_check
      _
    $region3: #{discriminator2_forward.1} parent=1 // pred_check_branch
      %21 = sbr.rel (0) target = $region5
    $region4: #{discriminator2_forward.1} parent=1 // pred_region
      _
    $region5: #{discriminator2_forward.1} parent=1 // pred_fallthru
      _
    // Predicated region
    $region6: #{discriminator2_forward.1} parent=1 // pred_check
      _
    $region7: #{discriminator2_forward.1} parent=1 // pred_check_branch
      %23 = sbr.rel (0) target = $region9
    $region8: #{discriminator2_forward.1} parent=1 // pred_region
      _
    $region9: #{discriminator2_forward.1} parent=1 // pred_fallthru
      _
    // Predicated region
    $region10: #{discriminator2_forward.1} parent=1 // pred_check
      _
    $region11: #{discriminator2_forward.1} parent=1 // pred_check_branch
      %25 = sbr.rel (0) target = $region13
    $region12: #{discriminator2_forward.1} parent=1 // pred_region
      _
    $region13: #{discriminator2_forward.1} parent=1 // pred_fallthru
      _
    // Predicated region
    $region14: #{discriminator2_forward.1} parent=1 // pred_check
      _
    $region15: #{discriminator2_forward.1} parent=1 // pred_check_branch
      %27 = sbr.rel (0) target = $region17
    $region16: #{discriminator2_forward.1} parent=1 // pred_region
      _
    $region17: #{discriminator2_forward.1} parent=1 // pred_fallthru
      _
    // Predicated region
    $region18: #{discriminator2_forward.1} parent=1 // pred_check
      _
    $region19: #{discriminator2_forward.1} parent=1 // pred_check_branch
      %29 = sbr.rel (0) target = $region21
    $region20: #{discriminator2_forward.1} parent=1 // pred_region
      %s31 = ssub.s32 3072, 3072
      %32 = vsyncadd [#allocation4], %s31
      %s33 = sshll.u32 [#allocation3], 4
      %s34 = int_to_ptr.vmem [resolvable:$true] %s33
      %39 = dma.hbm_to_vmem [thread:$0]  %s4, 3072, %s34, [#allocation4], 256, 256, 16
    $region21: #{discriminator2_forward.1} parent=1 // pred_fallthru
      _
    // Predicated region
    $region22: #{discriminator2_forward.1} parent=1 // pred_check
      _
    $region23: #{discriminator2_forward.1} parent=1 // pred_check_branch
      %41 = sbr.rel (0) target = $region25
    $region24: #{discriminator2_forward.1} parent=1 // pred_region
      %s43 = ssub.s32 16384, 16384
      %44 = vsyncadd [#allocation6], %s43
      %s45 = sshll.u32 [#allocation5], 4
      %s46 = int_to_ptr.vmem [resolvable:$true] %s45
      %51 = dma.hbm_to_vmem [thread:$0]  %s5, 16384, %s46, [#allocation6], 256, 256, 16
    $region25: #{discriminator2_forward.1} parent=1 // pred_fallthru
      _
    // Predicated region
    $region26: #{discriminator2_forward.1} parent=1 // pred_check
      _
    $region27: #{discriminator2_forward.1} parent=1 // pred_check_branch
      %53 = sbr.rel (0) target = $region29
    $region28: #{discriminator2_forward.1} parent=1 // pred_region
      _
    $region29: #{discriminator2_forward.1} parent=1 // pred_fallthru
      _
    // Predicated region
    $region30: #{discriminator2_forward.1} parent=1 // pred_check
      _
    $region31: #{discriminator2_forward.1} parent=1 // pred_check_branch
      %55 = sbr.rel (0) target = $region33
    $region32: #{discriminator2_forward.1} parent=1 // pred_region
      %s57 = ssub.s32 8192, 8192
      %58 = vsyncadd [#allocation6], %s57
      %s59 = sshll.u32 [#allocation7], 4
      %s60 = int_to_ptr.vmem [resolvable:$true] %s59
      %65 = dma.hbm_to_vmem [thread:$0]  %s7, 8192, %s60, [#allocation6], 128, 128, 8
    $region33: #{discriminator2_forward.1} parent=1 // pred_fallthru
      _
    // Predicated region
    $region34: #{discriminator2_forward.1} parent=1 // pred_check
      _
    $region35: #{discriminator2_forward.1} parent=1 // pred_check_branch
      %67 = sbr.rel (0) target = $region37
    $region36: #{discriminator2_forward.1} parent=1 // pred_region
      _
    $region37: #{discriminator2_forward.1} parent=1 // pred_fallthru
      _
    // Predicated region
    $region38: #{discriminator2_forward.1} parent=1 // pred_check
      _
    $region39: #{discriminator2_forward.1} parent=1 // pred_check_branch
      %69 = sbr.rel (0) target = $region41
    $region40: #{discriminator2_forward.1} parent=1 // pred_region
      _
    $region41: #{discriminator2_forward.1} parent=1 // pred_fallthru
      _
    // Predicated region
    $region42: #{discriminator2_forward.1} parent=1 // pred_check
      _
    $region43: #{discriminator2_forward.1} parent=1 // pred_check_branch
      %71 = sbr.rel (0) target = $region45
    $region44: #{discriminator2_forward.1} parent=1 // pred_region
      _
    $region45: #{discriminator2_forward.1} parent=1 // pred_fallthru
      _
    // Predicated region
    $region46: #{discriminator2_forward.1} parent=1 // pred_check
      _
    $region47: #{discriminator2_forward.1} parent=1 // pred_check_branch
      %73 = sbr.rel (0) target = $region49
    $region48: #{discriminator2_forward.1} parent=1 // pred_region
      %74 = dma.done [#allocation4], 3072
    $region49: #{discriminator2_forward.1} parent=1 // pred_fallthru
      _
    // Predicated region
    $region50: #{discriminator2_forward.1} parent=1 // pred_check
      _
    $region51: #{discriminator2_forward.1} parent=1 // pred_check_branch
      %76 = sbr.rel (0) target = $region53
    $region52: #{discriminator2_forward.1} parent=1 // pred_region
      %77 = dma.done [#allocation6], 16384
    $region53: #{discriminator2_forward.1} parent=1 // pred_fallthru
      _
    // Predicated region
    $region54: #{discriminator2_forward.1} parent=1 // pred_check
      _
    $region55: #{discriminator2_forward.1} parent=1 // pred_check_branch
      %79 = sbr.rel (0) target = $region57
    $region56: #{discriminator2_forward.1} parent=1 // pred_region
      %80 = dma.done [#allocation6], 8192
    $region57: #{discriminator2_forward.1} parent=1 // pred_fallthru
      _
    %v82 = vld [vmem:[%s0] sm:$0xff]
    %v83 = vld [vmem:[%s1] sm:$0xff]
    %v84 = vpack.c.bf16 %v82, %v82
    %v85 = vld [vmem:[#allocation3] sm:$0xff]
    %v86 = vld [vmem:[#allocation3 + $0x8] sm:$0xff]
    %v87 = vld [vmem:[#allocation3 + $0x10] sm:$0xff]
    %v88 = vld [vmem:[#allocation3 + $0x18] sm:$0xff]
    %v89 = vld [vmem:[#allocation3 + $0x20] sm:$0xff]
    %v90 = vld [vmem:[#allocation3 + $0x28] sm:$0xff]
    %v91 = vld [vmem:[#allocation3 + $0x30] sm:$0xff]
    %v92 = vld [vmem:[#allocation3 + $0x38] sm:$0xff]
    %v93 = vld [vmem:[#allocation3 + $0x40] sm:$0xff]
    %v94 = vld [vmem:[#allocation3 + $0x48] sm:$0xff]
    %v95 = vld [vmem:[#allocation3 + $0x50] sm:$0xff]
    %v96 = vld [vmem:[#allocation3 + $0x58] sm:$0xff]
    %v97 = vld [vmem:[#allocation3 + $0x60] sm:$0xff]
    %v98 = vld [vmem:[#allocation3 + $0x68] sm:$0xff]
    %v99 = vld [vmem:[#allocation3 + $0x70] sm:$0xff]
    %v100 = vld [vmem:[#allocation3 + $0x78] sm:$0xff]
    %v101 = vld [vmem:[#allocation3 + $0x80] sm:$0xff]
    %v102 = vld [vmem:[#allocation3 + $0x88] sm:$0xff]
    %v103 = vld [vmem:[#allocation3 + $0x90] sm:$0xff]
    %v104 = vld [vmem:[#allocation3 + $0x98] sm:$0xff]
    %v105 = vld [vmem:[#allocation3 + $0xa0] sm:$0xff]
    %v106 = vld [vmem:[#allocation3 + $0xa8] sm:$0xff]
    %v107 = vld [vmem:[#allocation3 + $0xb0] sm:$0xff]
    %v108 = vld [vmem:[#allocation3 + $0xb8] sm:$0xff]
    %v109 = vld [vmem:[%s2] sm:$0xf]
    %111 = vset.pattern.permute.xlu0 0
    %112 = vperm.xlu0 %111, %v83
    %v113 = vpop.permute.xlu0 %112
    %v116 = vlaneseq
    %v117 = vshrl.u32 %v116, 7
    %v118 = vsub.s32 0, %v117
    %v119 = vrot.slane %v109, %v118
    %v120 = vlaneseq
    %v121 = vshrl.u32 %v120, 7
    %v122 = vsub.s32 1, %v121
    %v123 = vrot.slane %v109, %v122
    %v124 = vlaneseq
    %v125 = vshrl.u32 %v124, 7
    %v126 = vsub.s32 2, %v125
    %v127 = vrot.slane %v109, %v126
    %v128 = vlaneseq
    %v129 = vshrl.u32 %v128, 7
    %v130 = vsub.s32 3, %v129
    %v131 = vrot.slane %v109, %v130
    %v136 = vmul.f32 %v113, %v119
    %v137 = vmul.f32 %v113, %v123
    %v138 = vmul.f32 %v113, %v127
    %v139 = vmul.f32 %v113, %v131
    %v164 = vunpack.c.l.b16 %v85
    %v165 = vunpack.c.h.b16 %v85
    %v166 = vunpack.c.l.b16 %v86
    %v167 = vunpack.c.h.b16 %v86
    %v168 = vunpack.c.l.b16 %v87
    %v169 = vunpack.c.h.b16 %v87
    %v170 = vunpack.c.l.b16 %v88
    %v171 = vunpack.c.h.b16 %v88
    %v172 = vunpack.c.l.b16 %v89
    %v173 = vunpack.c.h.b16 %v89
    %v174 = vunpack.c.l.b16 %v90
    %v175 = vunpack.c.h.b16 %v90
    %v176 = vunpack.c.l.b16 %v91
    %v177 = vunpack.c.h.b16 %v91
    %v178 = vunpack.c.l.b16 %v92
    %v179 = vunpack.c.h.b16 %v92
    %v180 = vunpack.c.l.b16 %v93
    %v181 = vunpack.c.h.b16 %v93
    %v182 = vunpack.c.l.b16 %v94
    %v183 = vunpack.c.h.b16 %v94
    %v184 = vunpack.c.l.b16 %v95
    %v185 = vunpack.c.h.b16 %v95
    %v186 = vunpack.c.l.b16 %v96
    %v187 = vunpack.c.h.b16 %v96
    %v188 = vunpack.c.l.b16 %v97
    %v189 = vunpack.c.h.b16 %v97
    %v190 = vunpack.c.l.b16 %v98
    %v191 = vunpack.c.h.b16 %v98
    %v192 = vunpack.c.l.b16 %v99
    %v193 = vunpack.c.h.b16 %v99
    %v194 = vunpack.c.l.b16 %v100
    %v195 = vunpack.c.h.b16 %v100
    %v196 = vunpack.c.l.b16 %v101
    %v197 = vunpack.c.h.b16 %v101
    %v198 = vunpack.c.l.b16 %v102
    %v199 = vunpack.c.h.b16 %v102
    %v200 = vunpack.c.l.b16 %v103
    %v201 = vunpack.c.h.b16 %v103
    %v202 = vunpack.c.l.b16 %v104
    %v203 = vunpack.c.h.b16 %v104
    %v204 = vunpack.c.l.b16 %v105
    %v205 = vunpack.c.h.b16 %v105
    %v206 = vunpack.c.l.b16 %v106
    %v207 = vunpack.c.h.b16 %v106
    %v208 = vunpack.c.l.b16 %v107
    %v209 = vunpack.c.h.b16 %v107
    %v210 = vunpack.c.l.b16 %v108
    %v211 = vunpack.c.h.b16 %v108
    %v212 = vpack.c.b16 %v168, %v164
    %v213 = vpack.c.b16 %v169, %v165
    %v214 = vpack.c.b16 %v170, %v166
    %v215 = vpack.c.b16 %v171, %v167
    %v216 = vpack.c.b16 %v176, %v172
    %v217 = vpack.c.b16 %v177, %v173
    %v218 = vpack.c.b16 %v178, %v174
    %v219 = vpack.c.b16 %v179, %v175
    %v220 = vpack.c.b16 %v184, %v180
    %v221 = vpack.c.b16 %v185, %v181
    %v222 = vpack.c.b16 %v186, %v182
    %v223 = vpack.c.b16 %v187, %v183
    %v224 = vpack.c.b16 %v192, %v188
    %v225 = vpack.c.b16 %v193, %v189
    %v226 = vpack.c.b16 %v194, %v190
    %v227 = vpack.c.b16 %v195, %v191
    %v228 = vpack.c.b16 %v200, %v196
    %v229 = vpack.c.b16 %v201, %v197
    %v230 = vpack.c.b16 %v202, %v198
    %v231 = vpack.c.b16 %v203, %v199
    %v232 = vpack.c.b16 %v208, %v204
    %v233 = vpack.c.b16 %v209, %v205
    %v234 = vpack.c.b16 %v210, %v206
    %v235 = vpack.c.b16 %v211, %v207
    %vm260 = vcmask 785408
    %v262 = vsel %vm260, %v84, 0
    %264 = vmatprep.subr.bf16.mxu0 %v213
    %265 = vmatpush1.bf16.msra.mxu0 %v212
    %266 = vmatprep.subr.bf16.mxu0 %v217
    %267 = vmatpush1.bf16.msra.mxu0 %v216
    %268 = vmatprep.subr.bf16.mxu0 %v221
    %269 = vmatpush1.bf16.msra.mxu0 %v220
    %270 = vmatprep.subr.bf16.mxu0 %v225
    %271 = vmatpush1.bf16.msra.mxu0 %v224
    %272 = vmatprep.subr.bf16.mxu0 %v229
    %273 = vmatpush1.bf16.msra.mxu0 %v228
    %274 = vmatprep.subr.bf16.mxu0 %v233
    %275 = vmatpush1.bf16.msra.mxu0 %v232
    %276 = vmatprep.subr.bf16.mxu0 0
    %277 = vmatpush1.bf16.msra.mxu0 0
    %278 = vmatprep.subr.bf16.mxu0 0
    %279 = vmatpush1.bf16.msra.mxu0 0
    %280 = vmatprep.subr.bf16.mxu0 0
    %281 = vmatpush1.bf16.msra.mxu0 0
    %282 = vmatprep.subr.bf16.mxu0 0
    %283 = vmatpush1.bf16.msra.mxu0 0
    %284 = vmatprep.subr.bf16.mxu0 0
    %285 = vmatpush1.bf16.msra.mxu0 0
    %286 = vmatprep.subr.bf16.mxu0 0
    %287 = vmatpush1.bf16.msra.mxu0 0
    %288 = vmatprep.subr.bf16.mxu0 0
    %289 = vmatpush1.bf16.msra.mxu0 0
    %290 = vmatprep.subr.bf16.mxu0 0
    %291 = vmatpush1.bf16.msra.mxu0 0
    %292 = vmatprep.subr.bf16.mxu0 0
    %293 = vmatpush1.bf16.msra.mxu0 0
    %294 = vmatprep.subr.bf16.mxu0 0
    %295 = vmatpush1.bf16.msra.mxu0 0
    %296 = vmatprep.mubr.bf16.mxu0 0
    %297 = vmatmul.mubr.bf16.gmra.mrb[0].mxu0 %v262
    %v298 = vpop.f32.mrb[0].mxu0
    %v299 = vadd.f32 %v136, %v298
    %v300 = vpop.f32.mrb[0].mxu0
    %v301 = vadd.f32 %v137, %v300
    %v302 = vpop.f32.mrb[0].mxu0
    %v303 = vpop.f32.mrb[0].mxu0
    %304 = vdwg.mxu0
    %305 = vmatprep.subr.bf16.mxu0 %v215
    %306 = vmatpush1.bf16.msra.mxu0 %v214
    %307 = vmatprep.subr.bf16.mxu0 %v219
    %308 = vmatpush1.bf16.msra.mxu0 %v218
    %309 = vmatprep.subr.bf16.mxu0 %v223
    %310 = vmatpush1.bf16.msra.mxu0 %v222
    %311 = vmatprep.subr.bf16.mxu0 %v227
    %312 = vmatpush1.bf16.msra.mxu0 %v226
    %313 = vmatprep.subr.bf16.mxu0 %v231
    %314 = vmatpush1.bf16.msra.mxu0 %v230
    %315 = vmatprep.subr.bf16.mxu0 %v235
    %316 = vmatpush1.bf16.msra.mxu0 %v234
    %317 = vmatprep.subr.bf16.mxu0 0
    %318 = vmatpush1.bf16.msra.mxu0 0
    %319 = vmatprep.subr.bf16.mxu0 0
    %320 = vmatpush1.bf16.msra.mxu0 0
    %321 = vmatprep.subr.bf16.mxu0 0
    %322 = vmatpush1.bf16.msra.mxu0 0
    %323 = vmatprep.subr.bf16.mxu0 0
    %324 = vmatpush1.bf16.msra.mxu0 0
    %325 = vmatprep.subr.bf16.mxu0 0
    %326 = vmatpush1.bf16.msra.mxu0 0
    %327 = vmatprep.subr.bf16.mxu0 0
    %328 = vmatpush1.bf16.msra.mxu0 0
    %329 = vmatprep.subr.bf16.mxu0 0
    %330 = vmatpush1.bf16.msra.mxu0 0
    %331 = vmatprep.subr.bf16.mxu0 0
    %332 = vmatpush1.bf16.msra.mxu0 0
    %333 = vmatprep.subr.bf16.mxu0 0
    %334 = vmatpush1.bf16.msra.mxu0 0
    %335 = vmatprep.subr.bf16.mxu0 0
    %336 = vmatpush1.bf16.msra.mxu0 0
    %337 = vmatprep.mubr.bf16.mxu0 0
    %338 = vmatmul.mubr.bf16.gmra.mrb[0].mxu0 %v262
    %v339 = vpop.f32.mrb[0].mxu0
    %v340 = vadd.f32 %v138, %v339
    %v341 = vpop.f32.mrb[0].mxu0
    %v342 = vadd.f32 %v139, %v341
    %v343 = vpop.f32.mrb[0].mxu0
    %v344 = vpop.f32.mrb[0].mxu0
    %345 = vdwg.mxu0
    %v346 = vld [vmem:[%s3] sm:$0xf]
    %v348 = vlaneseq
    %v349 = vshrl.u32 %v348, 7
    %v350 = vsub.s32 0, %v349
    %v351 = vrot.slane %v346, %v350
    %v352 = vlaneseq
    %v353 = vshrl.u32 %v352, 7
    %v354 = vsub.s32 1, %v353
    %v355 = vrot.slane %v346, %v354
    %v356 = vlaneseq
    %v357 = vshrl.u32 %v356, 7
    %v358 = vsub.s32 2, %v357
    %v359 = vrot.slane %v346, %v358
    %v360 = vlaneseq
    %v361 = vshrl.u32 %v360, 7
    %v362 = vsub.s32 3, %v361
    %v363 = vrot.slane %v346, %v362
    %v368 = vadd.f32 %v299, %v351
    %v369 = vadd.f32 %v301, %v355
    %v370 = vadd.f32 %v340, %v359
    %v371 = vadd.f32 %v342, %v363
    %vm372 = vcmp.gt.f32.partialorder %v368, 0.0
    %vm373 = vcmp.gt.f32.partialorder %v369, 0.0
    %vm374 = vcmp.gt.f32.partialorder %v370, 0.0
    %vm375 = vcmp.gt.f32.partialorder %v371, 0.0
    %v376 = vmul.f32 %v368, 0.01
    %v377 = vmul.f32 %v369, 0.01
    %v378 = vmul.f32 %v370, 0.01
    %v379 = vmul.f32 %v371, 0.01
    %v380 = vsel %vm372, %v368, %v376
    %v381 = vsel %vm373, %v369, %v377
    %v382 = vsel %vm374, %v370, %v378
    %v383 = vsel %vm375, %v371, %v379
    %v384 = vpack.c.bf16 %v380, %v380
    %v385 = vpack.c.bf16 %v381, %v381
    %v386 = vpack.c.bf16 %v382, %v382
    %v387 = vpack.c.bf16 %v383, %v383
    %v388 = vld [vmem:[#allocation5] sm:$0xff]
    %v389 = vld [vmem:[#allocation5 + $0x8] sm:$0xff]
    %v390 = vld [vmem:[#allocation5 + $0x10] sm:$0xff]
    %v391 = vld [vmem:[#allocation5 + $0x18] sm:$0xff]
    %v392 = vld [vmem:[#allocation5 + $0x20] sm:$0xff]
    %v393 = vld [vmem:[#allocation5 + $0x28] sm:$0xff]
    %v394 = vld [vmem:[#allocation5 + $0x30] sm:$0xff]
    %v395 = vld [vmem:[#allocation5 + $0x38] sm:$0xff]
    %v396 = vld [vmem:[#allocation5 + $0x40] sm:$0xff]
    %v397 = vld [vmem:[#allocation5 + $0x48] sm:$0xff]
    %v398 = vld [vmem:[#allocation5 + $0x50] sm:$0xff]
    %v399 = vld [vmem:[#allocation5 + $0x58] sm:$0xff]
    %v400 = vld [vmem:[#allocation5 + $0x60] sm:$0xff]
    %v401 = vld [vmem:[#allocation5 + $0x68] sm:$0xff]
    %v402 = vld [vmem:[#allocation5 + $0x70] sm:$0xff]
    %v403 = vld [vmem:[#allocation5 + $0x78] sm:$0xff]
    %v404 = vld [vmem:[#allocation5 + $0x80] sm:$0xff]
    %v405 = vld [vmem:[#allocation5 + $0x88] sm:$0xff]
    %v406 = vld [vmem:[#allocation5 + $0x90] sm:$0xff]
    %v407 = vld [vmem:[#allocation5 + $0x98] sm:$0xff]
    %v408 = vld [vmem:[#allocation5 + $0xa0] sm:$0xff]
    %v409 = vld [vmem:[#allocation5 + $0xa8] sm:$0xff]
    %v410 = vld [vmem:[#allocation5 + $0xb0] sm:$0xff]
    %v411 = vld [vmem:[#allocation5 + $0xb8] sm:$0xff]
    %v412 = vld [vmem:[#allocation5 + $0xc0] sm:$0xff]
    %v413 = vld [vmem:[#allocation5 + $0xc8] sm:$0xff]
    %v414 = vld [vmem:[#allocation5 + $0xd0] sm:$0xff]
    %v415 = vld [vmem:[#allocation5 + $0xd8] sm:$0xff]
    %v416 = vld [vmem:[#allocation5 + $0xe0] sm:$0xff]
    %v417 = vld [vmem:[#allocation5 + $0xe8] sm:$0xff]
    %v418 = vld [vmem:[#allocation5 + $0xf0] sm:$0xff]
    %v419 = vld [vmem:[#allocation5 + $0xf8] sm:$0xff]
    %v420 = vld [vmem:[#allocation5 + $0x100] sm:$0xff]
    %v421 = vld [vmem:[#allocation5 + $0x108] sm:$0xff]
    %v422 = vld [vmem:[#allocation5 + $0x110] sm:$0xff]
    %v423 = vld [vmem:[#allocation5 + $0x118] sm:$0xff]
    %v424 = vld [vmem:[#allocation5 + $0x120] sm:$0xff]
    %v425 = vld [vmem:[#allocation5 + $0x128] sm:$0xff]
    %v426 = vld [vmem:[#allocation5 + $0x130] sm:$0xff]
    %v427 = vld [vmem:[#allocation5 + $0x138] sm:$0xff]
    %v428 = vld [vmem:[#allocation5 + $0x140] sm:$0xff]
    %v429 = vld [vmem:[#allocation5 + $0x148] sm:$0xff]
    %v430 = vld [vmem:[#allocation5 + $0x150] sm:$0xff]
    %v431 = vld [vmem:[#allocation5 + $0x158] sm:$0xff]
    %v432 = vld [vmem:[#allocation5 + $0x160] sm:$0xff]
    %v433 = vld [vmem:[#allocation5 + $0x168] sm:$0xff]
    %v434 = vld [vmem:[#allocation5 + $0x170] sm:$0xff]
    %v435 = vld [vmem:[#allocation5 + $0x178] sm:$0xff]
    %v436 = vld [vmem:[#allocation5 + $0x180] sm:$0xff]
    %v437 = vld [vmem:[#allocation5 + $0x188] sm:$0xff]
    %v438 = vld [vmem:[#allocation5 + $0x190] sm:$0xff]
    %v439 = vld [vmem:[#allocation5 + $0x198] sm:$0xff]
    %v440 = vld [vmem:[#allocation5 + $0x1a0] sm:$0xff]
    %v441 = vld [vmem:[#allocation5 + $0x1a8] sm:$0xff]
    %v442 = vld [vmem:[#allocation5 + $0x1b0] sm:$0xff]
    %v443 = vld [vmem:[#allocation5 + $0x1b8] sm:$0xff]
    %v444 = vld [vmem:[#allocation5 + $0x1c0] sm:$0xff]
    %v445 = vld [vmem:[#allocation5 + $0x1c8] sm:$0xff]
    %v446 = vld [vmem:[#allocation5 + $0x1d0] sm:$0xff]
    %v447 = vld [vmem:[#allocation5 + $0x1d8] sm:$0xff]
    %v448 = vld [vmem:[#allocation5 + $0x1e0] sm:$0xff]
    %v449 = vld [vmem:[#allocation5 + $0x1e8] sm:$0xff]
    %v450 = vld [vmem:[#allocation5 + $0x1f0] sm:$0xff]
    %v451 = vld [vmem:[#allocation5 + $0x1f8] sm:$0xff]
    %v452 = vld [vmem:[#allocation5 + $0x200] sm:$0xff]
    %v453 = vld [vmem:[#allocation5 + $0x208] sm:$0xff]
    %v454 = vld [vmem:[#allocation5 + $0x210] sm:$0xff]
    %v455 = vld [vmem:[#allocation5 + $0x218] sm:$0xff]
    %v456 = vld [vmem:[#allocation5 + $0x220] sm:$0xff]
    %v457 = vld [vmem:[#allocation5 + $0x228] sm:$0xff]
    %v458 = vld [vmem:[#allocation5 + $0x230] sm:$0xff]
    %v459 = vld [vmem:[#allocation5 + $0x238] sm:$0xff]
    %v460 = vld [vmem:[#allocation5 + $0x240] sm:$0xff]
    %v461 = vld [vmem:[#allocation5 + $0x248] sm:$0xff]
    %v462 = vld [vmem:[#allocation5 + $0x250] sm:$0xff]
    %v463 = vld [vmem:[#allocation5 + $0x258] sm:$0xff]
    %v464 = vld [vmem:[#allocation5 + $0x260] sm:$0xff]
    %v465 = vld [vmem:[#allocation5 + $0x268] sm:$0xff]
    %v466 = vld [vmem:[#allocation5 + $0x270] sm:$0xff]
    %v467 = vld [vmem:[#allocation5 + $0x278] sm:$0xff]
    %v468 = vld [vmem:[#allocation5 + $0x280] sm:$0xff]
    %v469 = vld [vmem:[#allocation5 + $0x288] sm:$0xff]
    %v470 = vld [vmem:[#allocation5 + $0x290] sm:$0xff]
    %v471 = vld [vmem:[#allocation5 + $0x298] sm:$0xff]
    %v472 = vld [vmem:[#allocation5 + $0x2a0] sm:$0xff]
    %v473 = vld [vmem:[#allocation5 + $0x2a8] sm:$0xff]
    %v474 = vld [vmem:[#allocation5 + $0x2b0] sm:$0xff]
    %v475 = vld [vmem:[#allocation5 + $0x2b8] sm:$0xff]
    %v476 = vld [vmem:[#allocation5 + $0x2c0] sm:$0xff]
    %v477 = vld [vmem:[#allocation5 + $0x2c8] sm:$0xff]
    %v478 = vld [vmem:[#allocation5 + $0x2d0] sm:$0xff]
    %v479 = vld [vmem:[#allocation5 + $0x2d8] sm:$0xff]
    %v480 = vld [vmem:[#allocation5 + $0x2e0] sm:$0xff]
    %v481 = vld [vmem:[#allocation5 + $0x2e8] sm:$0xff]
    %v482 = vld [vmem:[#allocation5 + $0x2f0] sm:$0xff]
    %v483 = vld [vmem:[#allocation5 + $0x2f8] sm:$0xff]
    %v484 = vld [vmem:[#allocation5 + $0x300] sm:$0xff]
    %v485 = vld [vmem:[#allocation5 + $0x308] sm:$0xff]
    %v486 = vld [vmem:[#allocation5 + $0x310] sm:$0xff]
    %v487 = vld [vmem:[#allocation5 + $0x318] sm:$0xff]
    %v488 = vld [vmem:[#allocation5 + $0x320] sm:$0xff]
    %v489 = vld [vmem:[#allocation5 + $0x328] sm:$0xff]
    %v490 = vld [vmem:[#allocation5 + $0x330] sm:$0xff]
    %v491 = vld [vmem:[#allocation5 + $0x338] sm:$0xff]
    %v492 = vld [vmem:[#allocation5 + $0x340] sm:$0xff]
    %v493 = vld [vmem:[#allocation5 + $0x348] sm:$0xff]
    %v494 = vld [vmem:[#allocation5 + $0x350] sm:$0xff]
    %v495 = vld [vmem:[#allocation5 + $0x358] sm:$0xff]
    %v496 = vld [vmem:[#allocation5 + $0x360] sm:$0xff]
    %v497 = vld [vmem:[#allocation5 + $0x368] sm:$0xff]
    %v498 = vld [vmem:[#allocation5 + $0x370] sm:$0xff]
    %v499 = vld [vmem:[#allocation5 + $0x378] sm:$0xff]
    %v500 = vld [vmem:[#allocation5 + $0x380] sm:$0xff]
    %v501 = vld [vmem:[#allocation5 + $0x388] sm:$0xff]
    %v502 = vld [vmem:[#allocation5 + $0x390] sm:$0xff]
    %v503 = vld [vmem:[#allocation5 + $0x398] sm:$0xff]
    %v504 = vld [vmem:[#allocation5 + $0x3a0] sm:$0xff]
    %v505 = vld [vmem:[#allocation5 + $0x3a8] sm:$0xff]
    %v506 = vld [vmem:[#allocation5 + $0x3b0] sm:$0xff]
    %v507 = vld [vmem:[#allocation5 + $0x3b8] sm:$0xff]
    %v508 = vld [vmem:[#allocation5 + $0x3c0] sm:$0xff]
    %v509 = vld [vmem:[#allocation5 + $0x3c8] sm:$0xff]
    %v510 = vld [vmem:[#allocation5 + $0x3d0] sm:$0xff]
    %v511 = vld [vmem:[#allocation5 + $0x3d8] sm:$0xff]
    %v512 = vld [vmem:[#allocation5 + $0x3e0] sm:$0xff]
    %v513 = vld [vmem:[#allocation5 + $0x3e8] sm:$0xff]
    %v514 = vld [vmem:[#allocation5 + $0x3f0] sm:$0xff]
    %v515 = vld [vmem:[#allocation5 + $0x3f8] sm:$0xff]
    %v516 = vld [vmem:[%s6] sm:$0xf]
    %v518 = vlaneseq
    %v519 = vshrl.u32 %v518, 7
    %v520 = vsub.s32 0, %v519
    %v521 = vrot.slane %v516, %v520
    %v522 = vlaneseq
    %v523 = vshrl.u32 %v522, 7
    %v524 = vsub.s32 1, %v523
    %v525 = vrot.slane %v516, %v524
    %v526 = vlaneseq
    %v527 = vshrl.u32 %v526, 7
    %v528 = vsub.s32 2, %v527
    %v529 = vrot.slane %v516, %v528
    %v530 = vlaneseq
    %v531 = vshrl.u32 %v530, 7
    %v532 = vsub.s32 3, %v531
    %v533 = vrot.slane %v516, %v532
    %v666 = vunpack.c.l.b16 %v388
    %v667 = vunpack.c.h.b16 %v388
    %v668 = vunpack.c.l.b16 %v389
    %v669 = vunpack.c.h.b16 %v389
    %v670 = vunpack.c.l.b16 %v390
    %v671 = vunpack.c.h.b16 %v390
    %v672 = vunpack.c.l.b16 %v391
    %v673 = vunpack.c.h.b16 %v391
    %v674 = vunpack.c.l.b16 %v392
    %v675 = vunpack.c.h.b16 %v392
    %v676 = vunpack.c.l.b16 %v393
    %v677 = vunpack.c.h.b16 %v393
    %v678 = vunpack.c.l.b16 %v394
    %v679 = vunpack.c.h.b16 %v394
    %v680 = vunpack.c.l.b16 %v395
    %v681 = vunpack.c.h.b16 %v395
    %v682 = vunpack.c.l.b16 %v396
    %v683 = vunpack.c.h.b16 %v396
    %v684 = vunpack.c.l.b16 %v397
    %v685 = vunpack.c.h.b16 %v397
    %v686 = vunpack.c.l.b16 %v398
    %v687 = vunpack.c.h.b16 %v398
    %v688 = vunpack.c.l.b16 %v399
    %v689 = vunpack.c.h.b16 %v399
    %v690 = vunpack.c.l.b16 %v400
    %v691 = vunpack.c.h.b16 %v400
    %v692 = vunpack.c.l.b16 %v401
    %v693 = vunpack.c.h.b16 %v401
    %v694 = vunpack.c.l.b16 %v402
    %v695 = vunpack.c.h.b16 %v402
    %v696 = vunpack.c.l.b16 %v403
    %v697 = vunpack.c.h.b16 %v403
    %v698 = vunpack.c.l.b16 %v404
    %v699 = vunpack.c.h.b16 %v404
    %v700 = vunpack.c.l.b16 %v405
    %v701 = vunpack.c.h.b16 %v405
    %v702 = vunpack.c.l.b16 %v406
    %v703 = vunpack.c.h.b16 %v406
    %v704 = vunpack.c.l.b16 %v407
    %v705 = vunpack.c.h.b16 %v407
    %v706 = vunpack.c.l.b16 %v408
    %v707 = vunpack.c.h.b16 %v408
    %v708 = vunpack.c.l.b16 %v409
    %v709 = vunpack.c.h.b16 %v409
    %v710 = vunpack.c.l.b16 %v410
    %v711 = vunpack.c.h.b16 %v410
    %v712 = vunpack.c.l.b16 %v411
    %v713 = vunpack.c.h.b16 %v411
    %v714 = vunpack.c.l.b16 %v412
    %v715 = vunpack.c.h.b16 %v412
    %v716 = vunpack.c.l.b16 %v413
    %v717 = vunpack.c.h.b16 %v413
    %v718 = vunpack.c.l.b16 %v414
    %v719 = vunpack.c.h.b16 %v414
    %v720 = vunpack.c.l.b16 %v415
    %v721 = vunpack.c.h.b16 %v415
    %v722 = vunpack.c.l.b16 %v416
    %v723 = vunpack.c.h.b16 %v416
    %v724 = vunpack.c.l.b16 %v417
    %v725 = vunpack.c.h.b16 %v417
    %v726 = vunpack.c.l.b16 %v418
    %v727 = vunpack.c.h.b16 %v418
    %v728 = vunpack.c.l.b16 %v419
    %v729 = vunpack.c.h.b16 %v419
    %v730 = vunpack.c.l.b16 %v420
    %v731 = vunpack.c.h.b16 %v420
    %v732 = vunpack.c.l.b16 %v421
    %v733 = vunpack.c.h.b16 %v421
    %v734 = vunpack.c.l.b16 %v422
    %v735 = vunpack.c.h.b16 %v422
    %v736 = vunpack.c.l.b16 %v423
    %v737 = vunpack.c.h.b16 %v423
    %v738 = vunpack.c.l.b16 %v424
    %v739 = vunpack.c.h.b16 %v424
    %v740 = vunpack.c.l.b16 %v425
    %v741 = vunpack.c.h.b16 %v425
    %v742 = vunpack.c.l.b16 %v426
    %v743 = vunpack.c.h.b16 %v426
    %v744 = vunpack.c.l.b16 %v427
    %v745 = vunpack.c.h.b16 %v427
    %v746 = vunpack.c.l.b16 %v428
    %v747 = vunpack.c.h.b16 %v428
    %v748 = vunpack.c.l.b16 %v429
    %v749 = vunpack.c.h.b16 %v429
    %v750 = vunpack.c.l.b16 %v430
    %v751 = vunpack.c.h.b16 %v430
    %v752 = vunpack.c.l.b16 %v431
    %v753 = vunpack.c.h.b16 %v431
    %v754 = vunpack.c.l.b16 %v432
    %v755 = vunpack.c.h.b16 %v432
    %v756 = vunpack.c.l.b16 %v433
    %v757 = vunpack.c.h.b16 %v433
    %v758 = vunpack.c.l.b16 %v434
    %v759 = vunpack.c.h.b16 %v434
    %v760 = vunpack.c.l.b16 %v435
    %v761 = vunpack.c.h.b16 %v435
    %v762 = vunpack.c.l.b16 %v436
    %v763 = vunpack.c.h.b16 %v436
    %v764 = vunpack.c.l.b16 %v437
    %v765 = vunpack.c.h.b16 %v437
    %v766 = vunpack.c.l.b16 %v438
    %v767 = vunpack.c.h.b16 %v438
    %v768 = vunpack.c.l.b16 %v439
    %v769 = vunpack.c.h.b16 %v439
    %v770 = vunpack.c.l.b16 %v440
    %v771 = vunpack.c.h.b16 %v440
    %v772 = vunpack.c.l.b16 %v441
    %v773 = vunpack.c.h.b16 %v441
    %v774 = vunpack.c.l.b16 %v442
    %v775 = vunpack.c.h.b16 %v442
    %v776 = vunpack.c.l.b16 %v443
    %v777 = vunpack.c.h.b16 %v443
    %v778 = vunpack.c.l.b16 %v444
    %v779 = vunpack.c.h.b16 %v444
    %v780 = vunpack.c.l.b16 %v445
    %v781 = vunpack.c.h.b16 %v445
    %v782 = vunpack.c.l.b16 %v446
    %v783 = vunpack.c.h.b16 %v446
    %v784 = vunpack.c.l.b16 %v447
    %v785 = vunpack.c.h.b16 %v447
    %v786 = vunpack.c.l.b16 %v448
    %v787 = vunpack.c.h.b16 %v448
    %v788 = vunpack.c.l.b16 %v449
    %v789 = vunpack.c.h.b16 %v449
    %v790 = vunpack.c.l.b16 %v450
    %v791 = vunpack.c.h.b16 %v450
    %v792 = vunpack.c.l.b16 %v451
    %v793 = vunpack.c.h.b16 %v451
    %v794 = vunpack.c.l.b16 %v452
    %v795 = vunpack.c.h.b16 %v452
    %v796 = vunpack.c.l.b16 %v453
    %v797 = vunpack.c.h.b16 %v453
    %v798 = vunpack.c.l.b16 %v454
    %v799 = vunpack.c.h.b16 %v454
    %v800 = vunpack.c.l.b16 %v455
    %v801 = vunpack.c.h.b16 %v455
    %v802 = vunpack.c.l.b16 %v456
    %v803 = vunpack.c.h.b16 %v456
    %v804 = vunpack.c.l.b16 %v457
    %v805 = vunpack.c.h.b16 %v457
    %v806 = vunpack.c.l.b16 %v458
    %v807 = vunpack.c.h.b16 %v458
    %v808 = vunpack.c.l.b16 %v459
    %v809 = vunpack.c.h.b16 %v459
    %v810 = vunpack.c.l.b16 %v460
    %v811 = vunpack.c.h.b16 %v460
    %v812 = vunpack.c.l.b16 %v461
    %v813 = vunpack.c.h.b16 %v461
    %v814 = vunpack.c.l.b16 %v462
    %v815 = vunpack.c.h.b16 %v462
    %v816 = vunpack.c.l.b16 %v463
    %v817 = vunpack.c.h.b16 %v463
    %v818 = vunpack.c.l.b16 %v464
    %v819 = vunpack.c.h.b16 %v464
    %v820 = vunpack.c.l.b16 %v465
    %v821 = vunpack.c.h.b16 %v465
    %v822 = vunpack.c.l.b16 %v466
    %v823 = vunpack.c.h.b16 %v466
    %v824 = vunpack.c.l.b16 %v467
    %v825 = vunpack.c.h.b16 %v467
    %v826 = vunpack.c.l.b16 %v468
    %v827 = vunpack.c.h.b16 %v468
    %v828 = vunpack.c.l.b16 %v469
    %v829 = vunpack.c.h.b16 %v469
    %v830 = vunpack.c.l.b16 %v470
    %v831 = vunpack.c.h.b16 %v470
    %v832 = vunpack.c.l.b16 %v471
    %v833 = vunpack.c.h.b16 %v471
    %v834 = vunpack.c.l.b16 %v472
    %v835 = vunpack.c.h.b16 %v472
    %v836 = vunpack.c.l.b16 %v473
    %v837 = vunpack.c.h.b16 %v473
    %v838 = vunpack.c.l.b16 %v474
    %v839 = vunpack.c.h.b16 %v474
    %v840 = vunpack.c.l.b16 %v475
    %v841 = vunpack.c.h.b16 %v475
    %v842 = vunpack.c.l.b16 %v476
    %v843 = vunpack.c.h.b16 %v476
    %v844 = vunpack.c.l.b16 %v477
    %v845 = vunpack.c.h.b16 %v477
    %v846 = vunpack.c.l.b16 %v478
    %v847 = vunpack.c.h.b16 %v478
    %v848 = vunpack.c.l.b16 %v479
    %v849 = vunpack.c.h.b16 %v479
    %v850 = vunpack.c.l.b16 %v480
    %v851 = vunpack.c.h.b16 %v480
    %v852 = vunpack.c.l.b16 %v481
    %v853 = vunpack.c.h.b16 %v481
    %v854 = vunpack.c.l.b16 %v482
    %v855 = vunpack.c.h.b16 %v482
    %v856 = vunpack.c.l.b16 %v483
    %v857 = vunpack.c.h.b16 %v483
    %v858 = vunpack.c.l.b16 %v484
    %v859 = vunpack.c.h.b16 %v484
    %v860 = vunpack.c.l.b16 %v485
    %v861 = vunpack.c.h.b16 %v485
    %v862 = vunpack.c.l.b16 %v486
    %v863 = vunpack.c.h.b16 %v486
    %v864 = vunpack.c.l.b16 %v487
    %v865 = vunpack.c.h.b16 %v487
    %v866 = vunpack.c.l.b16 %v488
    %v867 = vunpack.c.h.b16 %v488
    %v868 = vunpack.c.l.b16 %v489
    %v869 = vunpack.c.h.b16 %v489
    %v870 = vunpack.c.l.b16 %v490
    %v871 = vunpack.c.h.b16 %v490
    %v872 = vunpack.c.l.b16 %v491
    %v873 = vunpack.c.h.b16 %v491
    %v874 = vunpack.c.l.b16 %v492
    %v875 = vunpack.c.h.b16 %v492
    %v876 = vunpack.c.l.b16 %v493
    %v877 = vunpack.c.h.b16 %v493
    %v878 = vunpack.c.l.b16 %v494
    %v879 = vunpack.c.h.b16 %v494
    %v880 = vunpack.c.l.b16 %v495
    %v881 = vunpack.c.h.b16 %v495
    %v882 = vunpack.c.l.b16 %v496
    %v883 = vunpack.c.h.b16 %v496
    %v884 = vunpack.c.l.b16 %v497
    %v885 = vunpack.c.h.b16 %v497
    %v886 = vunpack.c.l.b16 %v498
    %v887 = vunpack.c.h.b16 %v498
    %v888 = vunpack.c.l.b16 %v499
    %v889 = vunpack.c.h.b16 %v499
    %v890 = vunpack.c.l.b16 %v500
    %v891 = vunpack.c.h.b16 %v500
    %v892 = vunpack.c.l.b16 %v501
    %v893 = vunpack.c.h.b16 %v501
    %v894 = vunpack.c.l.b16 %v502
    %v895 = vunpack.c.h.b16 %v502
    %v896 = vunpack.c.l.b16 %v503
    %v897 = vunpack.c.h.b16 %v503
    %v898 = vunpack.c.l.b16 %v504
    %v899 = vunpack.c.h.b16 %v504
    %v900 = vunpack.c.l.b16 %v505
    %v901 = vunpack.c.h.b16 %v505
    %v902 = vunpack.c.l.b16 %v506
    %v903 = vunpack.c.h.b16 %v506
    %v904 = vunpack.c.l.b16 %v507
    %v905 = vunpack.c.h.b16 %v507
    %v906 = vunpack.c.l.b16 %v508
    %v907 = vunpack.c.h.b16 %v508
    %v908 = vunpack.c.l.b16 %v509
    %v909 = vunpack.c.h.b16 %v509
    %v910 = vunpack.c.l.b16 %v510
    %v911 = vunpack.c.h.b16 %v510
    %v912 = vunpack.c.l.b16 %v511
    %v913 = vunpack.c.h.b16 %v511
    %v914 = vunpack.c.l.b16 %v512
    %v915 = vunpack.c.h.b16 %v512
    %v916 = vunpack.c.l.b16 %v513
    %v917 = vunpack.c.h.b16 %v513
    %v918 = vunpack.c.l.b16 %v514
    %v919 = vunpack.c.h.b16 %v514
    %v920 = vunpack.c.l.b16 %v515
    %v921 = vunpack.c.h.b16 %v515
    %v922 = vpack.c.b16 %v670, %v666
    %v923 = vpack.c.b16 %v671, %v667
    %v924 = vpack.c.b16 %v672, %v668
    %v925 = vpack.c.b16 %v673, %v669
    %v926 = vpack.c.b16 %v678, %v674
    %v927 = vpack.c.b16 %v679, %v675
    %v928 = vpack.c.b16 %v680, %v676
    %v929 = vpack.c.b16 %v681, %v677
    %v930 = vpack.c.b16 %v686, %v682
    %v931 = vpack.c.b16 %v687, %v683
    %v932 = vpack.c.b16 %v688, %v684
    %v933 = vpack.c.b16 %v689, %v685
    %v934 = vpack.c.b16 %v694, %v690
    %v935 = vpack.c.b16 %v695, %v691
    %v936 = vpack.c.b16 %v696, %v692
    %v937 = vpack.c.b16 %v697, %v693
    %v938 = vpack.c.b16 %v702, %v698
    %v939 = vpack.c.b16 %v703, %v699
    %v940 = vpack.c.b16 %v704, %v700
    %v941 = vpack.c.b16 %v705, %v701
    %v942 = vpack.c.b16 %v710, %v706
    %v943 = vpack.c.b16 %v711, %v707
    %v944 = vpack.c.b16 %v712, %v708
    %v945 = vpack.c.b16 %v713, %v709
    %v946 = vpack.c.b16 %v718, %v714
    %v947 = vpack.c.b16 %v719, %v715
    %v948 = vpack.c.b16 %v720, %v716
    %v949 = vpack.c.b16 %v721, %v717
    %v950 = vpack.c.b16 %v726, %v722
    %v951 = vpack.c.b16 %v727, %v723
    %v952 = vpack.c.b16 %v728, %v724
    %v953 = vpack.c.b16 %v729, %v725
    %v954 = vpack.c.b16 %v734, %v730
    %v955 = vpack.c.b16 %v735, %v731
    %v956 = vpack.c.b16 %v736, %v732
    %v957 = vpack.c.b16 %v737, %v733
    %v958 = vpack.c.b16 %v742, %v738
    %v959 = vpack.c.b16 %v743, %v739
    %v960 = vpack.c.b16 %v744, %v740
    %v961 = vpack.c.b16 %v745, %v741
    %v962 = vpack.c.b16 %v750, %v746
    %v963 = vpack.c.b16 %v751, %v747
    %v964 = vpack.c.b16 %v752, %v748
    %v965 = vpack.c.b16 %v753, %v749
    %v966 = vpack.c.b16 %v758, %v754
    %v967 = vpack.c.b16 %v759, %v755
    %v968 = vpack.c.b16 %v760, %v756
    %v969 = vpack.c.b16 %v761, %v757
    %v970 = vpack.c.b16 %v766, %v762
    %v971 = vpack.c.b16 %v767, %v763
    %v972 = vpack.c.b16 %v768, %v764
    %v973 = vpack.c.b16 %v769, %v765
    %v974 = vpack.c.b16 %v774, %v770
    %v975 = vpack.c.b16 %v775, %v771
    %v976 = vpack.c.b16 %v776, %v772
    %v977 = vpack.c.b16 %v777, %v773
    %v978 = vpack.c.b16 %v782, %v778
    %v979 = vpack.c.b16 %v783, %v779
    %v980 = vpack.c.b16 %v784, %v780
    %v981 = vpack.c.b16 %v785, %v781
    %v982 = vpack.c.b16 %v790, %v786
    %v983 = vpack.c.b16 %v791, %v787
    %v984 = vpack.c.b16 %v792, %v788
    %v985 = vpack.c.b16 %v793, %v789
    %v986 = vpack.c.b16 %v798, %v794
    %v987 = vpack.c.b16 %v799, %v795
    %v988 = vpack.c.b16 %v800, %v796
    %v989 = vpack.c.b16 %v801, %v797
    %v990 = vpack.c.b16 %v806, %v802
    %v991 = vpack.c.b16 %v807, %v803
    %v992 = vpack.c.b16 %v808, %v804
    %v993 = vpack.c.b16 %v809, %v805
    %v994 = vpack.c.b16 %v814, %v810
    %v995 = vpack.c.b16 %v815, %v811
    %v996 = vpack.c.b16 %v816, %v812
    %v997 = vpack.c.b16 %v817, %v813
    %v998 = vpack.c.b16 %v822, %v818
    %v999 = vpack.c.b16 %v823, %v819
    %v1000 = vpack.c.b16 %v824, %v820
    %v1001 = vpack.c.b16 %v825, %v821
    %v1002 = vpack.c.b16 %v830, %v826
    %v1003 = vpack.c.b16 %v831, %v827
    %v1004 = vpack.c.b16 %v832, %v828
    %v1005 = vpack.c.b16 %v833, %v829
    %v1006 = vpack.c.b16 %v838, %v834
    %v1007 = vpack.c.b16 %v839, %v835
    %v1008 = vpack.c.b16 %v840, %v836
    %v1009 = vpack.c.b16 %v841, %v837
    %v1010 = vpack.c.b16 %v846, %v842
    %v1011 = vpack.c.b16 %v847, %v843
    %v1012 = vpack.c.b16 %v848, %v844
    %v1013 = vpack.c.b16 %v849, %v845
    %v1014 = vpack.c.b16 %v854, %v850
    %v1015 = vpack.c.b16 %v855, %v851
    %v1016 = vpack.c.b16 %v856, %v852
    %v1017 = vpack.c.b16 %v857, %v853
    %v1018 = vpack.c.b16 %v862, %v858
    %v1019 = vpack.c.b16 %v863, %v859
    %v1020 = vpack.c.b16 %v864, %v860
    %v1021 = vpack.c.b16 %v865, %v861
    %v1022 = vpack.c.b16 %v870, %v866
    %v1023 = vpack.c.b16 %v871, %v867
    %v1024 = vpack.c.b16 %v872, %v868
    %v1025 = vpack.c.b16 %v873, %v869
    %v1026 = vpack.c.b16 %v878, %v874
    %v1027 = vpack.c.b16 %v879, %v875
    %v1028 = vpack.c.b16 %v880, %v876
    %v1029 = vpack.c.b16 %v881, %v877
    %v1030 = vpack.c.b16 %v886, %v882
    %v1031 = vpack.c.b16 %v887, %v883
    %v1032 = vpack.c.b16 %v888, %v884
    %v1033 = vpack.c.b16 %v889, %v885
    %v1034 = vpack.c.b16 %v894, %v890
    %v1035 = vpack.c.b16 %v895, %v891
    %v1036 = vpack.c.b16 %v896, %v892
    %v1037 = vpack.c.b16 %v897, %v893
    %v1038 = vpack.c.b16 %v902, %v898
    %v1039 = vpack.c.b16 %v903, %v899
    %v1040 = vpack.c.b16 %v904, %v900
    %v1041 = vpack.c.b16 %v905, %v901
    %v1042 = vpack.c.b16 %v910, %v906
    %v1043 = vpack.c.b16 %v911, %v907
    %v1044 = vpack.c.b16 %v912, %v908
    %v1045 = vpack.c.b16 %v913, %v909
    %v1046 = vpack.c.b16 %v918, %v914
    %v1047 = vpack.c.b16 %v919, %v915
    %v1048 = vpack.c.b16 %v920, %v916
    %v1049 = vpack.c.b16 %v921, %v917
    %1178 = vmatprep.subr.bf16.mxu0 %v923
    %1179 = vmatpush1.bf16.msra.mxu0 %v922
    %1180 = vmatprep.subr.bf16.mxu0 %v927
    %1181 = vmatpush1.bf16.msra.mxu0 %v926
    %1182 = vmatprep.subr.bf16.mxu0 %v931
    %1183 = vmatpush1.bf16.msra.mxu0 %v930
    %1184 = vmatprep.subr.bf16.mxu0 %v935
    %1185 = vmatpush1.bf16.msra.mxu0 %v934
    %1186 = vmatprep.subr.bf16.mxu0 %v939
    %1187 = vmatpush1.bf16.msra.mxu0 %v938
    %1188 = vmatprep.subr.bf16.mxu0 %v943
    %1189 = vmatpush1.bf16.msra.mxu0 %v942
    %1190 = vmatprep.subr.bf16.mxu0 %v947
    %1191 = vmatpush1.bf16.msra.mxu0 %v946
    %1192 = vmatprep.subr.bf16.mxu0 %v951
    %1193 = vmatpush1.bf16.msra.mxu0 %v950
    %1194 = vmatprep.subr.bf16.mxu0 %v955
    %1195 = vmatpush1.bf16.msra.mxu0 %v954
    %1196 = vmatprep.subr.bf16.mxu0 %v959
    %1197 = vmatpush1.bf16.msra.mxu0 %v958
    %1198 = vmatprep.subr.bf16.mxu0 %v963
    %1199 = vmatpush1.bf16.msra.mxu0 %v962
    %1200 = vmatprep.subr.bf16.mxu0 %v967
    %1201 = vmatpush1.bf16.msra.mxu0 %v966
    %1202 = vmatprep.subr.bf16.mxu0 %v971
    %1203 = vmatpush1.bf16.msra.mxu0 %v970
    %1204 = vmatprep.subr.bf16.mxu0 %v975
    %1205 = vmatpush1.bf16.msra.mxu0 %v974
    %1206 = vmatprep.subr.bf16.mxu0 %v979
    %1207 = vmatpush1.bf16.msra.mxu0 %v978
    %1208 = vmatprep.subr.bf16.mxu0 %v983
    %1209 = vmatpush1.bf16.msra.mxu0 %v982
    %1210 = vmatprep.mubr.bf16.mxu0 %v385
    %1211 = vmatmul.mubr.bf16.gmra.mrb[0].mxu0 %v384
    %v1212 = vpop.f32.mrb[0].mxu0
    %v1213 = vadd.f32 %v521, %v1212
    %v1214 = vpop.f32.mrb[0].mxu0
    %v1215 = vadd.f32 %v525, %v1214
    %v1216 = vpop.f32.mrb[0].mxu0
    %v1217 = vpop.f32.mrb[0].mxu0
    %1218 = vdwg.mxu0
    %1219 = vmatprep.subr.bf16.mxu0 %v987
    %1220 = vmatpush1.bf16.msra.mxu0 %v986
    %1221 = vmatprep.subr.bf16.mxu0 %v991
    %1222 = vmatpush1.bf16.msra.mxu0 %v990
    %1223 = vmatprep.subr.bf16.mxu0 %v995
    %1224 = vmatpush1.bf16.msra.mxu0 %v994
    %1225 = vmatprep.subr.bf16.mxu0 %v999
    %1226 = vmatpush1.bf16.msra.mxu0 %v998
    %1227 = vmatprep.subr.bf16.mxu0 %v1003
    %1228 = vmatpush1.bf16.msra.mxu0 %v1002
    %1229 = vmatprep.subr.bf16.mxu0 %v1007
    %1230 = vmatpush1.bf16.msra.mxu0 %v1006
    %1231 = vmatprep.subr.bf16.mxu0 %v1011
    %1232 = vmatpush1.bf16.msra.mxu0 %v1010
    %1233 = vmatprep.subr.bf16.mxu0 %v1015
    %1234 = vmatpush1.bf16.msra.mxu0 %v1014
    %1235 = vmatprep.subr.bf16.mxu0 %v1019
    %1236 = vmatpush1.bf16.msra.mxu0 %v1018
    %1237 = vmatprep.subr.bf16.mxu0 %v1023
    %1238 = vmatpush1.bf16.msra.mxu0 %v1022
    %1239 = vmatprep.subr.bf16.mxu0 %v1027
    %1240 = vmatpush1.bf16.msra.mxu0 %v1026
    %1241 = vmatprep.subr.bf16.mxu0 %v1031
    %1242 = vmatpush1.bf16.msra.mxu0 %v1030
    %1243 = vmatprep.subr.bf16.mxu0 %v1035
    %1244 = vmatpush1.bf16.msra.mxu0 %v1034
    %1245 = vmatprep.subr.bf16.mxu0 %v1039
    %1246 = vmatpush1.bf16.msra.mxu0 %v1038
    %1247 = vmatprep.subr.bf16.mxu0 %v1043
    %1248 = vmatpush1.bf16.msra.mxu0 %v1042
    %1249 = vmatprep.subr.bf16.mxu0 %v1047
    %1250 = vmatpush1.bf16.msra.mxu0 %v1046
    %1251 = vmatprep.mubr.bf16.mxu0 %v387
    %1252 = vmatmul.mubr.bf16.gmra.mrb[0].mxu0 %v386
    %v1253 = vpop.f32.mrb[0].mxu0
    %v1254 = vadd.f32 %v1213, %v1253
    %v1255 = vpop.f32.mrb[0].mxu0
    %v1256 = vadd.f32 %v1215, %v1255
    %v1257 = vpop.f32.mrb[0].mxu0
    %v1258 = vpop.f32.mrb[0].mxu0
    %1259 = vdwg.mxu0
    %1260 = vmatprep.subr.bf16.mxu0 %v925
    %1261 = vmatpush1.bf16.msra.mxu0 %v924
    %1262 = vmatprep.subr.bf16.mxu0 %v929
    %1263 = vmatpush1.bf16.msra.mxu0 %v928
    %1264 = vmatprep.subr.bf16.mxu0 %v933
    %1265 = vmatpush1.bf16.msra.mxu0 %v932
    %1266 = vmatprep.subr.bf16.mxu0 %v937
    %1267 = vmatpush1.bf16.msra.mxu0 %v936
    %1268 = vmatprep.subr.bf16.mxu0 %v941
    %1269 = vmatpush1.bf16.msra.mxu0 %v940
    %1270 = vmatprep.subr.bf16.mxu0 %v945
    %1271 = vmatpush1.bf16.msra.mxu0 %v944
    %1272 = vmatprep.subr.bf16.mxu0 %v949
    %1273 = vmatpush1.bf16.msra.mxu0 %v948
    %1274 = vmatprep.subr.bf16.mxu0 %v953
    %1275 = vmatpush1.bf16.msra.mxu0 %v952
    %1276 = vmatprep.subr.bf16.mxu0 %v957
    %1277 = vmatpush1.bf16.msra.mxu0 %v956
    %1278 = vmatprep.subr.bf16.mxu0 %v961
    %1279 = vmatpush1.bf16.msra.mxu0 %v960
    %1280 = vmatprep.subr.bf16.mxu0 %v965
    %1281 = vmatpush1.bf16.msra.mxu0 %v964
    %1282 = vmatprep.subr.bf16.mxu0 %v969
    %1283 = vmatpush1.bf16.msra.mxu0 %v968
    %1284 = vmatprep.subr.bf16.mxu0 %v973
    %1285 = vmatpush1.bf16.msra.mxu0 %v972
    %1286 = vmatprep.subr.bf16.mxu0 %v977
    %1287 = vmatpush1.bf16.msra.mxu0 %v976
    %1288 = vmatprep.subr.bf16.mxu0 %v981
    %1289 = vmatpush1.bf16.msra.mxu0 %v980
    %1290 = vmatprep.subr.bf16.mxu0 %v985
    %1291 = vmatpush1.bf16.msra.mxu0 %v984
    %1292 = vmatprep.mubr.bf16.mxu0 %v385
    %1293 = vmatmul.mubr.bf16.gmra.mrb[0].mxu0 %v384
    %v1294 = vpop.f32.mrb[0].mxu0
    %v1295 = vadd.f32 %v529, %v1294
    %v1296 = vpop.f32.mrb[0].mxu0
    %v1297 = vadd.f32 %v533, %v1296
    %v1298 = vpop.f32.mrb[0].mxu0
    %v1299 = vpop.f32.mrb[0].mxu0
    %1300 = vdwg.mxu0
    %1301 = vmatprep.subr.bf16.mxu0 %v989
    %1302 = vmatpush1.bf16.msra.mxu0 %v988
    %1303 = vmatprep.subr.bf16.mxu0 %v993
    %1304 = vmatpush1.bf16.msra.mxu0 %v992
    %1305 = vmatprep.subr.bf16.mxu0 %v997
    %1306 = vmatpush1.bf16.msra.mxu0 %v996
    %1307 = vmatprep.subr.bf16.mxu0 %v1001
    %1308 = vmatpush1.bf16.msra.mxu0 %v1000
    %1309 = vmatprep.subr.bf16.mxu0 %v1005
    %1310 = vmatpush1.bf16.msra.mxu0 %v1004
    %1311 = vmatprep.subr.bf16.mxu0 %v1009
    %1312 = vmatpush1.bf16.msra.mxu0 %v1008
    %1313 = vmatprep.subr.bf16.mxu0 %v1013
    %1314 = vmatpush1.bf16.msra.mxu0 %v1012
    %1315 = vmatprep.subr.bf16.mxu0 %v1017
    %1316 = vmatpush1.bf16.msra.mxu0 %v1016
    %1317 = vmatprep.subr.bf16.mxu0 %v1021
    %1318 = vmatpush1.bf16.msra.mxu0 %v1020
    %1319 = vmatprep.subr.bf16.mxu0 %v1025
    %1320 = vmatpush1.bf16.msra.mxu0 %v1024
    %1321 = vmatprep.subr.bf16.mxu0 %v1029
    %1322 = vmatpush1.bf16.msra.mxu0 %v1028
    %1323 = vmatprep.subr.bf16.mxu0 %v1033
    %1324 = vmatpush1.bf16.msra.mxu0 %v1032
    %1325 = vmatprep.subr.bf16.mxu0 %v1037
    %1326 = vmatpush1.bf16.msra.mxu0 %v1036
    %1327 = vmatprep.subr.bf16.mxu0 %v1041
    %1328 = vmatpush1.bf16.msra.mxu0 %v1040
    %1329 = vmatprep.subr.bf16.mxu0 %v1045
    %1330 = vmatpush1.bf16.msra.mxu0 %v1044
    %1331 = vmatprep.subr.bf16.mxu0 %v1049
    %1332 = vmatpush1.bf16.msra.mxu0 %v1048
    %1333 = vmatprep.mubr.bf16.mxu0 %v387
    %1334 = vmatmul.mubr.bf16.gmra.mrb[0].mxu0 %v386
    %v1335 = vpop.f32.mrb[0].mxu0
    %v1336 = vadd.f32 %v1295, %v1335
    %v1337 = vpop.f32.mrb[0].mxu0
    %v1338 = vadd.f32 %v1297, %v1337
    %v1339 = vpop.f32.mrb[0].mxu0
    %v1340 = vpop.f32.mrb[0].mxu0
    %1341 = vdwg.mxu0
    %vm1342 = vcmp.gt.f32.partialorder %v1254, 0.0
    %vm1343 = vcmp.gt.f32.partialorder %v1256, 0.0
    %vm1344 = vcmp.gt.f32.partialorder %v1336, 0.0
    %vm1345 = vcmp.gt.f32.partialorder %v1338, 0.0
    %v1346 = vmul.f32 %v1254, 0.01
    %v1347 = vmul.f32 %v1256, 0.01
    %v1348 = vmul.f32 %v1336, 0.01
    %v1349 = vmul.f32 %v1338, 0.01
    %v1350 = vsel %vm1342, %v1254, %v1346
    %v1351 = vsel %vm1343, %v1256, %v1347
    %v1352 = vsel %vm1344, %v1336, %v1348
    %v1353 = vsel %vm1345, %v1338, %v1349
    %v1354 = vpack.c.bf16 %v1350, %v1350
    %v1355 = vpack.c.bf16 %v1351, %v1351
    %v1356 = vpack.c.bf16 %v1352, %v1352
    %v1357 = vpack.c.bf16 %v1353, %v1353
    %v1358 = vld [vmem:[#allocation7] sm:$0xff]
    %v1359 = vld [vmem:[#allocation7 + $0x8] sm:$0xff]
    %v1360 = vld [vmem:[#allocation7 + $0x10] sm:$0xff]
    %v1361 = vld [vmem:[#allocation7 + $0x18] sm:$0xff]
    %v1362 = vld [vmem:[#allocation7 + $0x20] sm:$0xff]
    %v1363 = vld [vmem:[#allocation7 + $0x28] sm:$0xff]
    %v1364 = vld [vmem:[#allocation7 + $0x30] sm:$0xff]
    %v1365 = vld [vmem:[#allocation7 + $0x38] sm:$0xff]
    %v1366 = vld [vmem:[#allocation7 + $0x40] sm:$0xff]
    %v1367 = vld [vmem:[#allocation7 + $0x48] sm:$0xff]
    %v1368 = vld [vmem:[#allocation7 + $0x50] sm:$0xff]
    %v1369 = vld [vmem:[#allocation7 + $0x58] sm:$0xff]
    %v1370 = vld [vmem:[#allocation7 + $0x60] sm:$0xff]
    %v1371 = vld [vmem:[#allocation7 + $0x68] sm:$0xff]
    %v1372 = vld [vmem:[#allocation7 + $0x70] sm:$0xff]
    %v1373 = vld [vmem:[#allocation7 + $0x78] sm:$0xff]
    %v1374 = vld [vmem:[#allocation7 + $0x80] sm:$0xff]
    %v1375 = vld [vmem:[#allocation7 + $0x88] sm:$0xff]
    %v1376 = vld [vmem:[#allocation7 + $0x90] sm:$0xff]
    %v1377 = vld [vmem:[#allocation7 + $0x98] sm:$0xff]
    %v1378 = vld [vmem:[#allocation7 + $0xa0] sm:$0xff]
    %v1379 = vld [vmem:[#allocation7 + $0xa8] sm:$0xff]
    %v1380 = vld [vmem:[#allocation7 + $0xb0] sm:$0xff]
    %v1381 = vld [vmem:[#allocation7 + $0xb8] sm:$0xff]
    %v1382 = vld [vmem:[#allocation7 + $0xc0] sm:$0xff]
    %v1383 = vld [vmem:[#allocation7 + $0xc8] sm:$0xff]
    %v1384 = vld [vmem:[#allocation7 + $0xd0] sm:$0xff]
    %v1385 = vld [vmem:[#allocation7 + $0xd8] sm:$0xff]
    %v1386 = vld [vmem:[#allocation7 + $0xe0] sm:$0xff]
    %v1387 = vld [vmem:[#allocation7 + $0xe8] sm:$0xff]
    %v1388 = vld [vmem:[#allocation7 + $0xf0] sm:$0xff]
    %v1389 = vld [vmem:[#allocation7 + $0xf8] sm:$0xff]
    %v1390 = vld [vmem:[#allocation7 + $0x100] sm:$0xff]
    %v1391 = vld [vmem:[#allocation7 + $0x108] sm:$0xff]
    %v1392 = vld [vmem:[#allocation7 + $0x110] sm:$0xff]
    %v1393 = vld [vmem:[#allocation7 + $0x118] sm:$0xff]
    %v1394 = vld [vmem:[#allocation7 + $0x120] sm:$0xff]
    %v1395 = vld [vmem:[#allocation7 + $0x128] sm:$0xff]
    %v1396 = vld [vmem:[#allocation7 + $0x130] sm:$0xff]
    %v1397 = vld [vmem:[#allocation7 + $0x138] sm:$0xff]
    %v1398 = vld [vmem:[#allocation7 + $0x140] sm:$0xff]
    %v1399 = vld [vmem:[#allocation7 + $0x148] sm:$0xff]
    %v1400 = vld [vmem:[#allocation7 + $0x150] sm:$0xff]
    %v1401 = vld [vmem:[#allocation7 + $0x158] sm:$0xff]
    %v1402 = vld [vmem:[#allocation7 + $0x160] sm:$0xff]
    %v1403 = vld [vmem:[#allocation7 + $0x168] sm:$0xff]
    %v1404 = vld [vmem:[#allocation7 + $0x170] sm:$0xff]
    %v1405 = vld [vmem:[#allocation7 + $0x178] sm:$0xff]
    %v1406 = vld [vmem:[#allocation7 + $0x180] sm:$0xff]
    %v1407 = vld [vmem:[#allocation7 + $0x188] sm:$0xff]
    %v1408 = vld [vmem:[#allocation7 + $0x190] sm:$0xff]
    %v1409 = vld [vmem:[#allocation7 + $0x198] sm:$0xff]
    %v1410 = vld [vmem:[#allocation7 + $0x1a0] sm:$0xff]
    %v1411 = vld [vmem:[#allocation7 + $0x1a8] sm:$0xff]
    %v1412 = vld [vmem:[#allocation7 + $0x1b0] sm:$0xff]
    %v1413 = vld [vmem:[#allocation7 + $0x1b8] sm:$0xff]
    %v1414 = vld [vmem:[#allocation7 + $0x1c0] sm:$0xff]
    %v1415 = vld [vmem:[#allocation7 + $0x1c8] sm:$0xff]
    %v1416 = vld [vmem:[#allocation7 + $0x1d0] sm:$0xff]
    %v1417 = vld [vmem:[#allocation7 + $0x1d8] sm:$0xff]
    %v1418 = vld [vmem:[#allocation7 + $0x1e0] sm:$0xff]
    %v1419 = vld [vmem:[#allocation7 + $0x1e8] sm:$0xff]
    %v1420 = vld [vmem:[#allocation7 + $0x1f0] sm:$0xff]
    %v1421 = vld [vmem:[#allocation7 + $0x1f8] sm:$0xff]
    %v1422 = vld [vmem:[%s8] sm:$0x3]
    %v1424 = vlaneseq
    %v1425 = vshrl.u32 %v1424, 7
    %v1426 = vsub.s32 0, %v1425
    %v1427 = vrot.slane %v1422, %v1426
    %v1428 = vlaneseq
    %v1429 = vshrl.u32 %v1428, 7
    %v1430 = vsub.s32 1, %v1429
    %v1431 = vrot.slane %v1422, %v1430
    %v1498 = vunpack.c.l.b16 %v1358
    %v1499 = vunpack.c.h.b16 %v1358
    %v1500 = vunpack.c.l.b16 %v1359
    %v1501 = vunpack.c.h.b16 %v1359
    %v1502 = vunpack.c.l.b16 %v1360
    %v1503 = vunpack.c.h.b16 %v1360
    %v1504 = vunpack.c.l.b16 %v1361
    %v1505 = vunpack.c.h.b16 %v1361
    %v1506 = vunpack.c.l.b16 %v1362
    %v1507 = vunpack.c.h.b16 %v1362
    %v1508 = vunpack.c.l.b16 %v1363
    %v1509 = vunpack.c.h.b16 %v1363
    %v1510 = vunpack.c.l.b16 %v1364
    %v1511 = vunpack.c.h.b16 %v1364
    %v1512 = vunpack.c.l.b16 %v1365
    %v1513 = vunpack.c.h.b16 %v1365
    %v1514 = vunpack.c.l.b16 %v1366
    %v1515 = vunpack.c.h.b16 %v1366
    %v1516 = vunpack.c.l.b16 %v1367
    %v1517 = vunpack.c.h.b16 %v1367
    %v1518 = vunpack.c.l.b16 %v1368
    %v1519 = vunpack.c.h.b16 %v1368
    %v1520 = vunpack.c.l.b16 %v1369
    %v1521 = vunpack.c.h.b16 %v1369
    %v1522 = vunpack.c.l.b16 %v1370
    %v1523 = vunpack.c.h.b16 %v1370
    %v1524 = vunpack.c.l.b16 %v1371
    %v1525 = vunpack.c.h.b16 %v1371
    %v1526 = vunpack.c.l.b16 %v1372
    %v1527 = vunpack.c.h.b16 %v1372
    %v1528 = vunpack.c.l.b16 %v1373
    %v1529 = vunpack.c.h.b16 %v1373
    %v1530 = vunpack.c.l.b16 %v1374
    %v1531 = vunpack.c.h.b16 %v1374
    %v1532 = vunpack.c.l.b16 %v1375
    %v1533 = vunpack.c.h.b16 %v1375
    %v1534 = vunpack.c.l.b16 %v1376
    %v1535 = vunpack.c.h.b16 %v1376
    %v1536 = vunpack.c.l.b16 %v1377
    %v1537 = vunpack.c.h.b16 %v1377
    %v1538 = vunpack.c.l.b16 %v1378
    %v1539 = vunpack.c.h.b16 %v1378
    %v1540 = vunpack.c.l.b16 %v1379
    %v1541 = vunpack.c.h.b16 %v1379
    %v1542 = vunpack.c.l.b16 %v1380
    %v1543 = vunpack.c.h.b16 %v1380
    %v1544 = vunpack.c.l.b16 %v1381
    %v1545 = vunpack.c.h.b16 %v1381
    %v1546 = vunpack.c.l.b16 %v1382
    %v1547 = vunpack.c.h.b16 %v1382
    %v1548 = vunpack.c.l.b16 %v1383
    %v1549 = vunpack.c.h.b16 %v1383
    %v1550 = vunpack.c.l.b16 %v1384
    %v1551 = vunpack.c.h.b16 %v1384
    %v1552 = vunpack.c.l.b16 %v1385
    %v1553 = vunpack.c.h.b16 %v1385
    %v1554 = vunpack.c.l.b16 %v1386
    %v1555 = vunpack.c.h.b16 %v1386
    %v1556 = vunpack.c.l.b16 %v1387
    %v1557 = vunpack.c.h.b16 %v1387
    %v1558 = vunpack.c.l.b16 %v1388
    %v1559 = vunpack.c.h.b16 %v1388
    %v1560 = vunpack.c.l.b16 %v1389
    %v1561 = vunpack.c.h.b16 %v1389
    %v1562 = vunpack.c.l.b16 %v1390
    %v1563 = vunpack.c.h.b16 %v1390
    %v1564 = vunpack.c.l.b16 %v1391
    %v1565 = vunpack.c.h.b16 %v1391
    %v1566 = vunpack.c.l.b16 %v1392
    %v1567 = vunpack.c.h.b16 %v1392
    %v1568 = vunpack.c.l.b16 %v1393
    %v1569 = vunpack.c.h.b16 %v1393
    %v1570 = vunpack.c.l.b16 %v1394
    %v1571 = vunpack.c.h.b16 %v1394
    %v1572 = vunpack.c.l.b16 %v1395
    %v1573 = vunpack.c.h.b16 %v1395
    %v1574 = vunpack.c.l.b16 %v1396
    %v1575 = vunpack.c.h.b16 %v1396
    %v1576 = vunpack.c.l.b16 %v1397
    %v1577 = vunpack.c.h.b16 %v1397
    %v1578 = vunpack.c.l.b16 %v1398
    %v1579 = vunpack.c.h.b16 %v1398
    %v1580 = vunpack.c.l.b16 %v1399
    %v1581 = vunpack.c.h.b16 %v1399
    %v1582 = vunpack.c.l.b16 %v1400
    %v1583 = vunpack.c.h.b16 %v1400
    %v1584 = vunpack.c.l.b16 %v1401
    %v1585 = vunpack.c.h.b16 %v1401
    %v1586 = vunpack.c.l.b16 %v1402
    %v1587 = vunpack.c.h.b16 %v1402
    %v1588 = vunpack.c.l.b16 %v1403
    %v1589 = vunpack.c.h.b16 %v1403
    %v1590 = vunpack.c.l.b16 %v1404
    %v1591 = vunpack.c.h.b16 %v1404
    %v1592 = vunpack.c.l.b16 %v1405
    %v1593 = vunpack.c.h.b16 %v1405
    %v1594 = vunpack.c.l.b16 %v1406
    %v1595 = vunpack.c.h.b16 %v1406
    %v1596 = vunpack.c.l.b16 %v1407
    %v1597 = vunpack.c.h.b16 %v1407
    %v1598 = vunpack.c.l.b16 %v1408
    %v1599 = vunpack.c.h.b16 %v1408
    %v1600 = vunpack.c.l.b16 %v1409
    %v1601 = vunpack.c.h.b16 %v1409
    %v1602 = vunpack.c.l.b16 %v1410
    %v1603 = vunpack.c.h.b16 %v1410
    %v1604 = vunpack.c.l.b16 %v1411
    %v1605 = vunpack.c.h.b16 %v1411
    %v1606 = vunpack.c.l.b16 %v1412
    %v1607 = vunpack.c.h.b16 %v1412
    %v1608 = vunpack.c.l.b16 %v1413
    %v1609 = vunpack.c.h.b16 %v1413
    %v1610 = vunpack.c.l.b16 %v1414
    %v1611 = vunpack.c.h.b16 %v1414
    %v1612 = vunpack.c.l.b16 %v1415
    %v1613 = vunpack.c.h.b16 %v1415
    %v1614 = vunpack.c.l.b16 %v1416
    %v1615 = vunpack.c.h.b16 %v1416
    %v1616 = vunpack.c.l.b16 %v1417
    %v1617 = vunpack.c.h.b16 %v1417
    %v1618 = vunpack.c.l.b16 %v1418
    %v1619 = vunpack.c.h.b16 %v1418
    %v1620 = vunpack.c.l.b16 %v1419
    %v1621 = vunpack.c.h.b16 %v1419
    %v1622 = vunpack.c.l.b16 %v1420
    %v1623 = vunpack.c.h.b16 %v1420
    %v1624 = vunpack.c.l.b16 %v1421
    %v1625 = vunpack.c.h.b16 %v1421
    %v1626 = vpack.c.b16 %v1500, %v1498
    %v1627 = vpack.c.b16 %v1501, %v1499
    %v1628 = vpack.c.b16 %v1504, %v1502
    %v1629 = vpack.c.b16 %v1505, %v1503
    %v1630 = vpack.c.b16 %v1508, %v1506
    %v1631 = vpack.c.b16 %v1509, %v1507
    %v1632 = vpack.c.b16 %v1512, %v1510
    %v1633 = vpack.c.b16 %v1513, %v1511
    %v1634 = vpack.c.b16 %v1516, %v1514
    %v1635 = vpack.c.b16 %v1517, %v1515
    %v1636 = vpack.c.b16 %v1520, %v1518
    %v1637 = vpack.c.b16 %v1521, %v1519
    %v1638 = vpack.c.b16 %v1524, %v1522
    %v1639 = vpack.c.b16 %v1525, %v1523
    %v1640 = vpack.c.b16 %v1528, %v1526
    %v1641 = vpack.c.b16 %v1529, %v1527
    %v1642 = vpack.c.b16 %v1532, %v1530
    %v1643 = vpack.c.b16 %v1533, %v1531
    %v1644 = vpack.c.b16 %v1536, %v1534
    %v1645 = vpack.c.b16 %v1537, %v1535
    %v1646 = vpack.c.b16 %v1540, %v1538
    %v1647 = vpack.c.b16 %v1541, %v1539
    %v1648 = vpack.c.b16 %v1544, %v1542
    %v1649 = vpack.c.b16 %v1545, %v1543
    %v1650 = vpack.c.b16 %v1548, %v1546
    %v1651 = vpack.c.b16 %v1549, %v1547
    %v1652 = vpack.c.b16 %v1552, %v1550
    %v1653 = vpack.c.b16 %v1553, %v1551
    %v1654 = vpack.c.b16 %v1556, %v1554
    %v1655 = vpack.c.b16 %v1557, %v1555
    %v1656 = vpack.c.b16 %v1560, %v1558
    %v1657 = vpack.c.b16 %v1561, %v1559
    %v1658 = vpack.c.b16 %v1564, %v1562
    %v1659 = vpack.c.b16 %v1565, %v1563
    %v1660 = vpack.c.b16 %v1568, %v1566
    %v1661 = vpack.c.b16 %v1569, %v1567
    %v1662 = vpack.c.b16 %v1572, %v1570
    %v1663 = vpack.c.b16 %v1573, %v1571
    %v1664 = vpack.c.b16 %v1576, %v1574
    %v1665 = vpack.c.b16 %v1577, %v1575
    %v1666 = vpack.c.b16 %v1580, %v1578
    %v1667 = vpack.c.b16 %v1581, %v1579
    %v1668 = vpack.c.b16 %v1584, %v1582
    %v1669 = vpack.c.b16 %v1585, %v1583
    %v1670 = vpack.c.b16 %v1588, %v1586
    %v1671 = vpack.c.b16 %v1589, %v1587
    %v1672 = vpack.c.b16 %v1592, %v1590
    %v1673 = vpack.c.b16 %v1593, %v1591
    %v1674 = vpack.c.b16 %v1596, %v1594
    %v1675 = vpack.c.b16 %v1597, %v1595
    %v1676 = vpack.c.b16 %v1600, %v1598
    %v1677 = vpack.c.b16 %v1601, %v1599
    %v1678 = vpack.c.b16 %v1604, %v1602
    %v1679 = vpack.c.b16 %v1605, %v1603
    %v1680 = vpack.c.b16 %v1608, %v1606
    %v1681 = vpack.c.b16 %v1609, %v1607
    %v1682 = vpack.c.b16 %v1612, %v1610
    %v1683 = vpack.c.b16 %v1613, %v1611
    %v1684 = vpack.c.b16 %v1616, %v1614
    %v1685 = vpack.c.b16 %v1617, %v1615
    %v1686 = vpack.c.b16 %v1620, %v1618
    %v1687 = vpack.c.b16 %v1621, %v1619
    %v1688 = vpack.c.b16 %v1624, %v1622
    %v1689 = vpack.c.b16 %v1625, %v1623
    %1754 = vmatprep.subr.bf16.mxu0 %v1627
    %1755 = vmatpush1.bf16.msra.mxu0 %v1626
    %1756 = vmatprep.subr.bf16.mxu0 %v1629
    %1757 = vmatpush1.bf16.msra.mxu0 %v1628
    %1758 = vmatprep.subr.bf16.mxu0 %v1631
    %1759 = vmatpush1.bf16.msra.mxu0 %v1630
    %1760 = vmatprep.subr.bf16.mxu0 %v1633
    %1761 = vmatpush1.bf16.msra.mxu0 %v1632
    %1762 = vmatprep.subr.bf16.mxu0 %v1635
    %1763 = vmatpush1.bf16.msra.mxu0 %v1634
    %1764 = vmatprep.subr.bf16.mxu0 %v1637
    %1765 = vmatpush1.bf16.msra.mxu0 %v1636
    %1766 = vmatprep.subr.bf16.mxu0 %v1639
    %1767 = vmatpush1.bf16.msra.mxu0 %v1638
    %1768 = vmatprep.subr.bf16.mxu0 %v1641
    %1769 = vmatpush1.bf16.msra.mxu0 %v1640
    %1770 = vmatprep.subr.bf16.mxu0 %v1643
    %1771 = vmatpush1.bf16.msra.mxu0 %v1642
    %1772 = vmatprep.subr.bf16.mxu0 %v1645
    %1773 = vmatpush1.bf16.msra.mxu0 %v1644
    %1774 = vmatprep.subr.bf16.mxu0 %v1647
    %1775 = vmatpush1.bf16.msra.mxu0 %v1646
    %1776 = vmatprep.subr.bf16.mxu0 %v1649
    %1777 = vmatpush1.bf16.msra.mxu0 %v1648
    %1778 = vmatprep.subr.bf16.mxu0 %v1651
    %1779 = vmatpush1.bf16.msra.mxu0 %v1650
    %1780 = vmatprep.subr.bf16.mxu0 %v1653
    %1781 = vmatpush1.bf16.msra.mxu0 %v1652
    %1782 = vmatprep.subr.bf16.mxu0 %v1655
    %1783 = vmatpush1.bf16.msra.mxu0 %v1654
    %1784 = vmatprep.subr.bf16.mxu0 %v1657
    %1785 = vmatpush1.bf16.msra.mxu0 %v1656
    %1786 = vmatprep.mubr.bf16.mxu0 %v1355
    %1787 = vmatmul.mubr.bf16.gmra.mrb[0].mxu0 %v1354
    %v1788 = vpop.f32.mrb[0].mxu0
    %v1789 = vadd.f32 %v1427, %v1788
    %v1790 = vpop.f32.mrb[0].mxu0
    %v1791 = vadd.f32 %v1431, %v1790
    %v1792 = vpop.f32.mrb[0].mxu0
    %v1793 = vpop.f32.mrb[0].mxu0
    %1794 = vdwg.mxu0
    %1795 = vmatprep.subr.bf16.mxu0 %v1659
    %1796 = vmatpush1.bf16.msra.mxu0 %v1658
    %1797 = vmatprep.subr.bf16.mxu0 %v1661
    %1798 = vmatpush1.bf16.msra.mxu0 %v1660
    %1799 = vmatprep.subr.bf16.mxu0 %v1663
    %1800 = vmatpush1.bf16.msra.mxu0 %v1662
    %1801 = vmatprep.subr.bf16.mxu0 %v1665
    %1802 = vmatpush1.bf16.msra.mxu0 %v1664
    %1803 = vmatprep.subr.bf16.mxu0 %v1667
    %1804 = vmatpush1.bf16.msra.mxu0 %v1666
    %1805 = vmatprep.subr.bf16.mxu0 %v1669
    %1806 = vmatpush1.bf16.msra.mxu0 %v1668
    %1807 = vmatprep.subr.bf16.mxu0 %v1671
    %1808 = vmatpush1.bf16.msra.mxu0 %v1670
    %1809 = vmatprep.subr.bf16.mxu0 %v1673
    %1810 = vmatpush1.bf16.msra.mxu0 %v1672
    %1811 = vmatprep.subr.bf16.mxu0 %v1675
    %1812 = vmatpush1.bf16.msra.mxu0 %v1674
    %1813 = vmatprep.subr.bf16.mxu0 %v1677
    %1814 = vmatpush1.bf16.msra.mxu0 %v1676
    %1815 = vmatprep.subr.bf16.mxu0 %v1679
    %1816 = vmatpush1.bf16.msra.mxu0 %v1678
    %1817 = vmatprep.subr.bf16.mxu0 %v1681
    %1818 = vmatpush1.bf16.msra.mxu0 %v1680
    %1819 = vmatprep.subr.bf16.mxu0 %v1683
    %1820 = vmatpush1.bf16.msra.mxu0 %v1682
    %1821 = vmatprep.subr.bf16.mxu0 %v1685
    %1822 = vmatpush1.bf16.msra.mxu0 %v1684
    %1823 = vmatprep.subr.bf16.mxu0 %v1687
    %1824 = vmatpush1.bf16.msra.mxu0 %v1686
    %1825 = vmatprep.subr.bf16.mxu0 %v1689
    %1826 = vmatpush1.bf16.msra.mxu0 %v1688
    %1827 = vmatprep.mubr.bf16.mxu0 %v1357
    %1828 = vmatmul.mubr.bf16.gmra.mrb[0].mxu0 %v1356
    %v1829 = vpop.f32.mrb[0].mxu0
    %v1830 = vadd.f32 %v1789, %v1829
    %v1831 = vpop.f32.mrb[0].mxu0
    %v1832 = vadd.f32 %v1791, %v1831
    %v1833 = vpop.f32.mrb[0].mxu0
    %v1834 = vpop.f32.mrb[0].mxu0
    %1835 = vdwg.mxu0
    %vm1836 = vcmp.gt.f32.partialorder %v1830, 0.0
    %vm1837 = vcmp.gt.f32.partialorder %v1832, 0.0
    %v1838 = vmul.f32 %v1830, 0.01
    %v1839 = vmul.f32 %v1832, 0.01
    %v1840 = vsel %vm1836, %v1830, %v1838
    %v1841 = vsel %vm1837, %v1832, %v1839
    %v1842 = vld [vmem:[%s9] sm:$0x3]
    %v1844 = vlaneseq
    %v1845 = vshrl.u32 %v1844, 7
    %v1846 = vsub.s32 0, %v1845
    %v1847 = vrot.slane %v1842, %v1846
    %v1848 = vlaneseq
    %v1849 = vshrl.u32 %v1848, 7
    %v1850 = vsub.s32 1, %v1849
    %v1851 = vrot.slane %v1842, %v1850
    %v1854 = vmul.f32 %v1840, %v1847
    %v1855 = vmul.f32 %v1841, %v1851
    %v1856 = vadd.f32 %v1854, %v1855
    %1857 = vadd.xlane.f32.xlu0 %v1856
    %v1858 = vpop.xlane.xlu0 %1857
    %v1859 = vld [vmem:[#allocation2] sm:$0x1]
    %v1861 = vlaneseq
    %v1862 = vshrl.u32 %v1861, 7
    %v1863 = vsub.s32 0, %v1862
    %v1864 = vrot.slane %v1859, %v1863
    %v1866 = vadd.f32 %v1858, %v1864
    %vm1867 = vcmask 7168
    %1868 = vst.msk [vmem:[%s11] sm:$0xff] %vm1867, %v1866
    // Predicated region
    $region58: #{discriminator2_forward.1} parent=1 // pred_check
      _
    $region59: #{discriminator2_forward.1} parent=1 // pred_check_branch
      %1870 = sbr.rel (0) target = $region61
    $region60: #{discriminator2_forward.1} parent=1 // pred_region
      _
    $region61: #{discriminator2_forward.1} parent=1 // pred_fallthru
      _
    // Predicated region
    $region62: #{discriminator2_forward.1} parent=1 // pred_check
      _
    $region63: #{discriminator2_forward.1} parent=1 // pred_check_branch
      %1872 = sbr.rel (0) target = $region65
    $region64: #{discriminator2_forward.1} parent=1 // pred_region
      _
    $region65: #{discriminator2_forward.1} parent=1 // pred_fallthru
      _
    %1873 = vsyncpa [#allocation4], 1
    %1874 = vsyncpa [#allocation6], 1

</llo_original>
